<compile_context>
chip_gen: v7x
topology: tpu7x:2x2x1
jax: 0.10.0
libtpu: 0.0.40
codegen_flags: <defaults>
</compile_context>

<pallas_src>
import jax
import jax.numpy as jnp
from jax import lax
from jax.experimental import pallas as pl
from jax.experimental.pallas import tpu as pltpu

# globals mirroring the reference script
coding_time = 10
time_steps = 100
hidden_dims = 16
output_dim = 2
is_bias = True

VTH = 1.0
DT = 1.0
R_M = 1.0  # membrane resistance used in mem_update_pra


# ----------------------------- Pallas kernel ------------------------------ #
def _snn_kernel(x_ref, w1_ref, b1_ref, tau1_ref, w2t_ref, b2t_ref, tau2t_ref,
                out_ref, d1_sc, spk_sc):
    # x_ref   : (seq*batch, input_size)   time-major, flattened over (seq, batch)
    # w1_ref  : (in, hid)   b1_ref: (1, hid)   tau1_ref: (1, hid)
    # w2t_ref : (odim, hid) b2t_ref: (odim, 1) tau2t_ref: (odim, 1)   (channel-major)
    # out_ref : (odim, seq, batch)        channel-major, batch in lanes
    # d1_sc   : (seq*batch, hid) VMEM     pre-scaled layer-1 drive
    # spk_sc  : (seq, batch, hid) VMEM    staged spikes
    seq, batch, hid = spk_sc.shape
    odim = out_ref.shape[0]

    # -------------------- loop-invariant prologue (hoisted) --------------- #
    alpha1 = jax.nn.sigmoid(tau1_ref[...])              # (1, hid)
    alpha2 = jax.nn.sigmoid(tau2t_ref[...])             # (odim, 1)
    alpha1_b = jnp.broadcast_to(alpha1, (batch, hid))   # hoisted: one broadcast total

    # Fold (1-alpha)*R_m / (1-alpha) into the tiny weights & biases once.
    scale1 = (1.0 - alpha1) * R_M                        # (1, hid)
    w1s = w1_ref[...] * scale1                           # (in, hid)
    b1s = b1_ref[...] * scale1                           # (1, hid)
    w2ts = w2t_ref[...] * (1.0 - alpha2)                 # (odim, hid) row-scaled
    b2ts = b2t_ref[...] * (1.0 - alpha2)                 # (odim, 1)

    # Layer-1 feedforward for ALL timesteps: one MXU matmul, off the serial path.
    d1_sc[...] = jnp.dot(x_ref[...], w1s,
                         preferred_element_type=jnp.float32) + b1s

    # ------------- recurrence: spiking LIF layer (pure VPU chain) --------- #
    def lif_step(t, carry):
        mem1, spk1 = carry                                # vreg-carried state
        off = pl.multiple_of(t * batch, batch)
        d1 = d1_sc[pl.ds(off, batch), :]                  # pre-scaled drive
        mem1 = mem1 * alpha1_b + d1 - (VTH * DT) * spk1   # reset w/ PREVIOUS spike
        spk1 = (mem1 - VTH > 0.0).astype(jnp.float32)     # strict '>' heaviside
        spk_sc[t] = spk1                                  # stage; off the dep-chain
        return mem1, spk1

    zeros_h = jnp.zeros((batch, hid), jnp.float32)
    lif_unroll = True if seq <= 32 else 8                 # bounded unroll at seq=100
    lax.fori_loop(0, seq, lif_step, (zeros_h, zeros_h), unroll=lif_unroll)

    # ------------- readout integrator as triangular alpha-power matmul ---- #
    # mem2_c[t] = sum_{s<=t} alpha_c^(t-s) * d2_c[s]   (first-order linear IIR)
    spk_all = spk_sc[...]                                  # (seq, batch, hid)
    t_io = lax.broadcasted_iota(jnp.int32, (seq, seq), 0)
    s_io = lax.broadcasted_iota(jnp.int32, (seq, seq), 1)
    diff = jnp.maximum((t_io - s_io).astype(jnp.float32), 0.0)
    tri = t_io >= s_io

    for c in range(odim):                                  # static loop, odim == 2
        a_c = jnp.maximum(alpha2[c:c + 1, :], 1e-30)       # (1,1); guard log(0)
        w2c = w2ts[c:c + 1, :]                             # (1, hid)
        b2c = b2ts[c:c + 1, :]                             # (1,1)
        # Pre-scaled layer-2 drive for ALL timesteps, directly in (seq, batch)
        # layout (lane reduction over hid); off the serial path.
        d2_c = jnp.sum(spk_all * w2c, axis=-1) + b2c       # (seq, batch)
        # L_c[t,s] = alpha_c^(t-s) for s<=t else 0
        L_c = jnp.where(tri, jnp.exp(diff * jnp.log(a_c)), 0.0)   # (seq, seq)
        # One MXU push + one contiguous (seq, batch) store per channel.
        out_ref[c] = jnp.dot(L_c, d2_c, preferred_element_type=jnp.float32)


def snn_forward_pallas(x, params):
    """x: (batch, seq, input_size) float32 -> d2_output: (batch, seq, 2)."""
    w1, b1, tau1, w2, b2, tau2 = params
    batch, seq, input_size = x.shape
    hid = w1.shape[1]
    odim = w2.shape[1]

    # time-major + flattened over (seq, batch) so layer 1 is one matmul
    x2d = jnp.transpose(x, (1, 0, 2)).reshape(seq * batch, input_size)
    x2d = x2d.astype(jnp.float32)

    # channel-major views of the (tiny) readout parameters — layout only
    w2t = jnp.transpose(w2)        # (odim, hid)
    b2t = jnp.transpose(b2)        # (odim, 1)
    tau2t = jnp.transpose(tau2)    # (odim, 1)

    vmem = pltpu.MemorySpace.VMEM
    # TODO(synk): for non-toy batch on v7x, add a leading "parallel" grid axis over
    # batch chunks (CompilerParams(dimension_semantics=("parallel",))) and set
    # vmem_limit_bytes deliberately (64 MiB physical on v7x); at these sizes a single
    # gridless call with whole-array VMEM residency is fastest on all generations.
    out_cm = pl.pallas_call(
        _snn_kernel,
        out_shape=jax.ShapeDtypeStruct((odim, seq, batch), jnp.float32),
        in_specs=[pl.BlockSpec(memory_space=vmem)] * 7,
        out_specs=pl.BlockSpec(memory_space=vmem),
        scratch_shapes=[
            pltpu.VMEM((seq * batch, hid), jnp.float32),   # pre-scaled layer-1 drive
            pltpu.VMEM((seq, batch, hid), jnp.float32),    # staged spikes
        ],
    )(x2d, w1, b1, tau1, w2t, b2t, tau2t)

    return jnp.transpose(out_cm, (2, 1, 0))                # (batch, seq, 2)


# --------------------------- plain-JAX glue -------------------------------- #
@jax.jit
def dense_vanilla_forward(x, target, position, params):
    """Mirrors Dense_vanilla.forward: returns (loss, d2_output, correct, total).

    Loss/accuracy bookkeeping is fully vectorized over timesteps (no host
    syncs); it mirrors the reference exactly, including CrossEntropyLoss
    being applied on top of softmax(output) as in the PyTorch code.
    """
    d2_output = snn_forward_pallas(x, params)                 # (B, S, 2)
    batch, seq, _ = x.shape

    threshold = time_steps - (position + 1) * coding_time     # (B,)
    steps = jnp.arange(seq)                                   # (S,)
    mask = steps[None, :] > threshold[:, None]                # (B, S) bool

    probs = jax.nn.softmax(d2_output, axis=-1)                # (B, S, 2)
    tgt = target.astype(jnp.int32)                            # (B, S)
    logp = jax.nn.log_softmax(probs, axis=-1)                 # CE on softmax'd output (as in reference)
    ce = -jnp.take_along_axis(logp, tgt[..., None], axis=-1)[..., 0]  # (B, S)

    n_sel = jnp.sum(mask, axis=0)                             # (S,)
    per_t = jnp.sum(jnp.where(mask, ce, 0.0), axis=0) / jnp.maximum(n_sel, 1)
    loss = jnp.sum(jnp.where(n_sel > 0, per_t, 0.0))          # sum of per-step means

    pred = jnp.argmax(probs, axis=-1)                         # (B, S)
    correct = jnp.sum(jnp.where(mask, pred == tgt, False))
    total = jnp.sum(n_sel)
    return loss, d2_output, correct, total


# ----------------------------- parameter init ------------------------------ #
def init_params(key, input_size, hid, odim):
    k1, k2, k3, k4, k5, k6 = jax.random.split(key, 6)
    lim1 = 1.0 / jnp.sqrt(input_size)
    lim2 = 1.0 / jnp.sqrt(hid)
    w1 = jax.random.uniform(k1, (input_size, hid), jnp.float32, -lim1, lim1)
    b1 = jax.random.uniform(k2, (1, hid), jnp.float32, -lim1, lim1)
    tau1 = jax.random.uniform(k3, (1, hid), jnp.float32, 0.0, 4.0)
    w2 = jax.random.uniform(k4, (hid, odim), jnp.float32, -lim2, lim2)
    b2 = jax.random.uniform(k5, (1, odim), jnp.float32, -lim2, lim2)
    tau2 = jax.random.uniform(k6, (1, odim), jnp.float32, 0.0, 4.0)
    return (w1, b1, tau1, w2, b2, tau2)


if __name__ == "__main__":
    key = jax.random.PRNGKey(0)
    batch, seq, input_size = 8, 16, 4

    kp, kx, kt, kpos = jax.random.split(key, 4)
    params = init_params(kp, input_size, hidden_dims, output_dim)

    # spiking-style binary inputs, integer class targets, per-sample positions
    x = (jax.random.uniform(kx, (batch, seq, input_size)) < 0.3).astype(jnp.float32)
    target = jax.random.randint(kt, (batch, seq), 0, output_dim).astype(jnp.float32)
    # positions chosen so some timesteps pass the "i > time_steps-(pos+1)*coding_time" gate
    position = jax.random.randint(kpos, (batch,), 8, 10)

    loss, d2_output, correct, total = dense_vanilla_forward(x, target, position, params)
    jax.block_until_ready((loss, d2_output, correct, total))

    assert d2_output.shape == (batch, seq, output_dim)
    print("KERNEL_OK")
</pallas_src>

<mosaic_0001>
module attributes {stable_mosaic.version = 11 : i64} {
  func.func @_snn_kernel(%arg0: memref<128x4xf32, #tpu.memory_space<vmem>>, %arg1: memref<4x16xf32, #tpu.memory_space<vmem>>, %arg2: memref<1x16xf32, #tpu.memory_space<vmem>>, %arg3: memref<1x16xf32, #tpu.memory_space<vmem>>, %arg4: memref<2x16xf32, #tpu.memory_space<vmem>>, %arg5: memref<2x1xf32, #tpu.memory_space<vmem>>, %arg6: memref<2x1xf32, #tpu.memory_space<vmem>>, %arg7: memref<2x16x8xf32, #tpu.memory_space<vmem>>, %arg8: memref<128x16xf32, #tpu.memory_space<vmem>>, %arg9: memref<16x8x16xf32, #tpu.memory_space<vmem>>) attributes {dimension_semantics = [], scalar_prefetch = 0 : i64, scratch_operands = 2 : i64, tpu.core_type = #tpu.core_type<tc>} {
    %c0 = arith.constant 0 : index
    %c0_0 = arith.constant 0 : index
    %0 = vector.load %arg3[%c0, %c0_0] : memref<1x16xf32, #tpu.memory_space<vmem>>, vector<1x16xf32>
    %1 = arith.negf %0 : vector<1x16xf32>
    %2 = math.exp %1 : vector<1x16xf32>
    %cst = arith.constant 1.000000e+00 : f32
    %3 = vector.broadcast %cst : f32 to vector<1x16xf32>
    %4 = arith.addf %3, %2 : vector<1x16xf32>
    %5 = arith.divf %3, %4 : vector<1x16xf32>
    %c0_1 = arith.constant 0 : index
    %c0_2 = arith.constant 0 : index
    %6 = vector.load %arg6[%c0_1, %c0_2] : memref<2x1xf32, #tpu.memory_space<vmem>>, vector<2x1xf32>
    %7 = arith.negf %6 : vector<2x1xf32>
    %8 = math.exp %7 : vector<2x1xf32>
    %cst_3 = arith.constant 1.000000e+00 : f32
    %9 = vector.broadcast %cst_3 : f32 to vector<2x1xf32>
    %10 = arith.addf %9, %8 : vector<2x1xf32>
    %11 = arith.divf %9, %10 : vector<2x1xf32>
    %12 = vector.shape_cast %5 : vector<1x16xf32> to vector<1x16xf32>
    %13 = vector.broadcast %12 : vector<1x16xf32> to vector<8x16xf32>
    %cst_4 = arith.constant 1.000000e+00 : f32
    %14 = vector.broadcast %cst_4 : f32 to vector<1x16xf32>
    %15 = arith.subf %14, %5 : vector<1x16xf32>
    %cst_5 = arith.constant 1.000000e+00 : f32
    %16 = vector.broadcast %cst_5 : f32 to vector<1x16xf32>
    %17 = arith.mulf %15, %16 : vector<1x16xf32>
    %c0_6 = arith.constant 0 : index
    %c0_7 = arith.constant 0 : index
    %18 = vector.load %arg1[%c0_6, %c0_7] : memref<4x16xf32, #tpu.memory_space<vmem>>, vector<4x16xf32>
    %19 = vector.broadcast %17 : vector<1x16xf32> to vector<4x16xf32>
    %20 = arith.mulf %18, %19 : vector<4x16xf32>
    %c0_8 = arith.constant 0 : index
    %c0_9 = arith.constant 0 : index
    %21 = vector.load %arg2[%c0_8, %c0_9] : memref<1x16xf32, #tpu.memory_space<vmem>>, vector<1x16xf32>
    %22 = arith.mulf %21, %17 : vector<1x16xf32>
    %c0_10 = arith.constant 0 : index
    %c0_11 = arith.constant 0 : index
    %23 = vector.load %arg4[%c0_10, %c0_11] : memref<2x16xf32, #tpu.memory_space<vmem>>, vector<2x16xf32>
    %cst_12 = arith.constant 1.000000e+00 : f32
    %24 = vector.broadcast %cst_12 : f32 to vector<2x1xf32>
    %25 = arith.subf %24, %11 : vector<2x1xf32>
    %26 = vector.broadcast %25 : vector<2x1xf32> to vector<2x16xf32>
    %27 = arith.mulf %23, %26 : vector<2x16xf32>
    %c0_13 = arith.constant 0 : index
    %c0_14 = arith.constant 0 : index
    %28 = vector.load %arg5[%c0_13, %c0_14] : memref<2x1xf32, #tpu.memory_space<vmem>>, vector<2x1xf32>
    %cst_15 = arith.constant 1.000000e+00 : f32
    %29 = vector.broadcast %cst_15 : f32 to vector<2x1xf32>
    %30 = arith.subf %29, %11 : vector<2x1xf32>
    %31 = arith.mulf %28, %30 : vector<2x1xf32>
    %c0_16 = arith.constant 0 : index
    %c0_17 = arith.constant 0 : index
    %32 = vector.load %arg0[%c0_16, %c0_17] : memref<128x4xf32, #tpu.memory_space<vmem>>, vector<128x4xf32>
    %cst_18 = arith.constant dense<0.000000e+00> : vector<128x16xf32>
    %33 = tpu.matmul %32, %20, %cst_18 {dimension_numbers = #tpu.dot_dimension_numbers<[1], [0], [0], [1], [0, 0, 1, 1], [], []>} : vector<128x4xf32>, vector<4x16xf32>, vector<128x16xf32> -> vector<128x16xf32>
    %34 = vector.broadcast %22 : vector<1x16xf32> to vector<128x16xf32>
    %35 = arith.addf %33, %34 : vector<128x16xf32>
    %c0_19 = arith.constant 0 : index
    %c0_20 = arith.constant 0 : index
    %36 = vector.load %arg8[%c0_19, %c0_20] : memref<128x16xf32, #tpu.memory_space<vmem>>, vector<128x16xf32>
    tpu.vector_store %arg8[%c0_19, %c0_20], %35 {strides = array<i32>} : memref<128x16xf32, #tpu.memory_space<vmem>>, vector<128x16xf32>,
    %cst_21 = arith.constant 0.000000e+00 : f32
    %37 = vector.broadcast %cst_21 : f32 to vector<8x16xf32>
    %c0_i32 = arith.constant 0 : i32
    %c8_i32 = arith.constant 8 : i32
    %38 = arith.muli %c0_i32, %c8_i32 : i32
    %39 = tpu.assume_multiple %38, 8 : i32
    %40 = arith.index_cast %39 : i32 to index
    %c0_22 = arith.constant 0 : index
    %41 = vector.load %arg8[%40, %c0_22] : memref<128x16xf32, #tpu.memory_space<vmem>>, vector<8x16xf32>
    %42 = arith.mulf %37, %13 : vector<8x16xf32>
    %43 = arith.addf %42, %41 : vector<8x16xf32>
    %cst_23 = arith.constant 1.000000e+00 : f32
    %44 = vector.broadcast %cst_23 : f32 to vector<8x16xf32>
    %45 = arith.mulf %44, %37 : vector<8x16xf32>
    %46 = arith.subf %43, %45 : vector<8x16xf32>
    %cst_24 = arith.constant 1.000000e+00 : f32
    %47 = vector.broadcast %cst_24 : f32 to vector<8x16xf32>
    %48 = arith.subf %46, %47 : vector<8x16xf32>
    %cst_25 = arith.constant 0.000000e+00 : f32
    %49 = vector.broadcast %cst_25 : f32 to vector<8x16xf32>
    %50 = arith.cmpf ogt, %48, %49 : vector<8x16xf32>
    %51 = arith.extui %50 : vector<8x16xi1> to vector<8x16xi32>
    %52 = arith.sitofp %51 : vector<8x16xi32> to vector<8x16xf32>
    %53 = arith.index_cast %c0_i32 : i32 to index
    %c0_26 = arith.constant 0 : index
    %c0_27 = arith.constant 0 : index
    %54 = vector.load %arg9[%53, %c0_26, %c0_27] : memref<16x8x16xf32, #tpu.memory_space<vmem>>, vector<1x8x16xf32>
    %55 = vector.shape_cast %54 : vector<1x8x16xf32> to vector<8x16xf32>
    %56 = vector.shape_cast %52 : vector<8x16xf32> to vector<1x8x16xf32>
    tpu.vector_store %arg9[%53, %c0_26, %c0_27], %56 {strides = array<i32>} : memref<16x8x16xf32, #tpu.memory_space<vmem>>, vector<1x8x16xf32>,
    %c1_i32 = arith.constant 1 : i32
    %c8_i32_28 = arith.constant 8 : i32
    %57 = arith.muli %c1_i32, %c8_i32_28 : i32
    %58 = tpu.assume_multiple %57, 8 : i32
    %59 = arith.index_cast %58 : i32 to index
    %c0_29 = arith.constant 0 : index
    %60 = vector.load %arg8[%59, %c0_29] : memref<128x16xf32, #tpu.memory_space<vmem>>, vector<8x16xf32>
    %61 = arith.mulf %46, %13 : vector<8x16xf32>
    %62 = arith.addf %61, %60 : vector<8x16xf32>
    %cst_30 = arith.constant 1.000000e+00 : f32
    %63 = vector.broadcast %cst_30 : f32 to vector<8x16xf32>
    %64 = arith.mulf %63, %52 : vector<8x16xf32>
    %65 = arith.subf %62, %64 : vector<8x16xf32>
    %cst_31 = arith.constant 1.000000e+00 : f32
    %66 = vector.broadcast %cst_31 : f32 to vector<8x16xf32>
    %67 = arith.subf %65, %66 : vector<8x16xf32>
    %cst_32 = arith.constant 0.000000e+00 : f32
    %68 = vector.broadcast %cst_32 : f32 to vector<8x16xf32>
    %69 = arith.cmpf ogt, %67, %68 : vector<8x16xf32>
    %70 = arith.extui %69 : vector<8x16xi1> to vector<8x16xi32>
    %71 = arith.sitofp %70 : vector<8x16xi32> to vector<8x16xf32>
    %72 = arith.index_cast %c1_i32 : i32 to index
    %c0_33 = arith.constant 0 : index
    %c0_34 = arith.constant 0 : index
    %73 = vector.load %arg9[%72, %c0_33, %c0_34] : memref<16x8x16xf32, #tpu.memory_space<vmem>>, vector<1x8x16xf32>
    %74 = vector.shape_cast %73 : vector<1x8x16xf32> to vector<8x16xf32>
    %75 = vector.shape_cast %71 : vector<8x16xf32> to vector<1x8x16xf32>
    tpu.vector_store %arg9[%72, %c0_33, %c0_34], %75 {strides = array<i32>} : memref<16x8x16xf32, #tpu.memory_space<vmem>>, vector<1x8x16xf32>,
    %c2_i32 = arith.constant 2 : i32
    %c8_i32_35 = arith.constant 8 : i32
    %76 = arith.muli %c2_i32, %c8_i32_35 : i32
    %77 = tpu.assume_multiple %76, 8 : i32
    %78 = arith.index_cast %77 : i32 to index
    %c0_36 = arith.constant 0 : index
    %79 = vector.load %arg8[%78, %c0_36] : memref<128x16xf32, #tpu.memory_space<vmem>>, vector<8x16xf32>
    %80 = arith.mulf %65, %13 : vector<8x16xf32>
    %81 = arith.addf %80, %79 : vector<8x16xf32>
    %cst_37 = arith.constant 1.000000e+00 : f32
    %82 = vector.broadcast %cst_37 : f32 to vector<8x16xf32>
    %83 = arith.mulf %82, %71 : vector<8x16xf32>
    %84 = arith.subf %81, %83 : vector<8x16xf32>
    %cst_38 = arith.constant 1.000000e+00 : f32
    %85 = vector.broadcast %cst_38 : f32 to vector<8x16xf32>
    %86 = arith.subf %84, %85 : vector<8x16xf32>
    %cst_39 = arith.constant 0.000000e+00 : f32
    %87 = vector.broadcast %cst_39 : f32 to vector<8x16xf32>
    %88 = arith.cmpf ogt, %86, %87 : vector<8x16xf32>
    %89 = arith.extui %88 : vector<8x16xi1> to vector<8x16xi32>
    %90 = arith.sitofp %89 : vector<8x16xi32> to vector<8x16xf32>
    %91 = arith.index_cast %c2_i32 : i32 to index
    %c0_40 = arith.constant 0 : index
    %c0_41 = arith.constant 0 : index
    %92 = vector.load %arg9[%91, %c0_40, %c0_41] : memref<16x8x16xf32, #tpu.memory_space<vmem>>, vector<1x8x16xf32>
    %93 = vector.shape_cast %92 : vector<1x8x16xf32> to vector<8x16xf32>
    %94 = vector.shape_cast %90 : vector<8x16xf32> to vector<1x8x16xf32>
    tpu.vector_store %arg9[%91, %c0_40, %c0_41], %94 {strides = array<i32>} : memref<16x8x16xf32, #tpu.memory_space<vmem>>, vector<1x8x16xf32>,
    %c3_i32 = arith.constant 3 : i32
    %c8_i32_42 = arith.constant 8 : i32
    %95 = arith.muli %c3_i32, %c8_i32_42 : i32
    %96 = tpu.assume_multiple %95, 8 : i32
    %97 = arith.index_cast %96 : i32 to index
    %c0_43 = arith.constant 0 : index
    %98 = vector.load %arg8[%97, %c0_43] : memref<128x16xf32, #tpu.memory_space<vmem>>, vector<8x16xf32>
    %99 = arith.mulf %84, %13 : vector<8x16xf32>
    %100 = arith.addf %99, %98 : vector<8x16xf32>
    %cst_44 = arith.constant 1.000000e+00 : f32
    %101 = vector.broadcast %cst_44 : f32 to vector<8x16xf32>
    %102 = arith.mulf %101, %90 : vector<8x16xf32>
    %103 = arith.subf %100, %102 : vector<8x16xf32>
    %cst_45 = arith.constant 1.000000e+00 : f32
    %104 = vector.broadcast %cst_45 : f32 to vector<8x16xf32>
    %105 = arith.subf %103, %104 : vector<8x16xf32>
    %cst_46 = arith.constant 0.000000e+00 : f32
    %106 = vector.broadcast %cst_46 : f32 to vector<8x16xf32>
    %107 = arith.cmpf ogt, %105, %106 : vector<8x16xf32>
    %108 = arith.extui %107 : vector<8x16xi1> to vector<8x16xi32>
    %109 = arith.sitofp %108 : vector<8x16xi32> to vector<8x16xf32>
    %110 = arith.index_cast %c3_i32 : i32 to index
    %c0_47 = arith.constant 0 : index
    %c0_48 = arith.constant 0 : index
    %111 = vector.load %arg9[%110, %c0_47, %c0_48] : memref<16x8x16xf32, #tpu.memory_space<vmem>>, vector<1x8x16xf32>
    %112 = vector.shape_cast %111 : vector<1x8x16xf32> to vector<8x16xf32>
    %113 = vector.shape_cast %109 : vector<8x16xf32> to vector<1x8x16xf32>
    tpu.vector_store %arg9[%110, %c0_47, %c0_48], %113 {strides = array<i32>} : memref<16x8x16xf32, #tpu.memory_space<vmem>>, vector<1x8x16xf32>,
    %c4_i32 = arith.constant 4 : i32
    %c8_i32_49 = arith.constant 8 : i32
    %114 = arith.muli %c4_i32, %c8_i32_49 : i32
    %115 = tpu.assume_multiple %114, 8 : i32
    %116 = arith.index_cast %115 : i32 to index
    %c0_50 = arith.constant 0 : index
    %117 = vector.load %arg8[%116, %c0_50] : memref<128x16xf32, #tpu.memory_space<vmem>>, vector<8x16xf32>
    %118 = arith.mulf %103, %13 : vector<8x16xf32>
    %119 = arith.addf %118, %117 : vector<8x16xf32>
    %cst_51 = arith.constant 1.000000e+00 : f32
    %120 = vector.broadcast %cst_51 : f32 to vector<8x16xf32>
    %121 = arith.mulf %120, %109 : vector<8x16xf32>
    %122 = arith.subf %119, %121 : vector<8x16xf32>
    %cst_52 = arith.constant 1.000000e+00 : f32
    %123 = vector.broadcast %cst_52 : f32 to vector<8x16xf32>
    %124 = arith.subf %122, %123 : vector<8x16xf32>
    %cst_53 = arith.constant 0.000000e+00 : f32
    %125 = vector.broadcast %cst_53 : f32 to vector<8x16xf32>
    %126 = arith.cmpf ogt, %124, %125 : vector<8x16xf32>
    %127 = arith.extui %126 : vector<8x16xi1> to vector<8x16xi32>
    %128 = arith.sitofp %127 : vector<8x16xi32> to vector<8x16xf32>
    %129 = arith.index_cast %c4_i32 : i32 to index
    %c0_54 = arith.constant 0 : index
    %c0_55 = arith.constant 0 : index
    %130 = vector.load %arg9[%129, %c0_54, %c0_55] : memref<16x8x16xf32, #tpu.memory_space<vmem>>, vector<1x8x16xf32>
    %131 = vector.shape_cast %130 : vector<1x8x16xf32> to vector<8x16xf32>
    %132 = vector.shape_cast %128 : vector<8x16xf32> to vector<1x8x16xf32>
    tpu.vector_store %arg9[%129, %c0_54, %c0_55], %132 {strides = array<i32>} : memref<16x8x16xf32, #tpu.memory_space<vmem>>, vector<1x8x16xf32>,
    %c5_i32 = arith.constant 5 : i32
    %c8_i32_56 = arith.constant 8 : i32
    %133 = arith.muli %c5_i32, %c8_i32_56 : i32
    %134 = tpu.assume_multiple %133, 8 : i32
    %135 = arith.index_cast %134 : i32 to index
    %c0_57 = arith.constant 0 : index
    %136 = vector.load %arg8[%135, %c0_57] : memref<128x16xf32, #tpu.memory_space<vmem>>, vector<8x16xf32>
    %137 = arith.mulf %122, %13 : vector<8x16xf32>
    %138 = arith.addf %137, %136 : vector<8x16xf32>
    %cst_58 = arith.constant 1.000000e+00 : f32
    %139 = vector.broadcast %cst_58 : f32 to vector<8x16xf32>
    %140 = arith.mulf %139, %128 : vector<8x16xf32>
    %141 = arith.subf %138, %140 : vector<8x16xf32>
    %cst_59 = arith.constant 1.000000e+00 : f32
    %142 = vector.broadcast %cst_59 : f32 to vector<8x16xf32>
    %143 = arith.subf %141, %142 : vector<8x16xf32>
    %cst_60 = arith.constant 0.000000e+00 : f32
    %144 = vector.broadcast %cst_60 : f32 to vector<8x16xf32>
    %145 = arith.cmpf ogt, %143, %144 : vector<8x16xf32>
    %146 = arith.extui %145 : vector<8x16xi1> to vector<8x16xi32>
    %147 = arith.sitofp %146 : vector<8x16xi32> to vector<8x16xf32>
    %148 = arith.index_cast %c5_i32 : i32 to index
    %c0_61 = arith.constant 0 : index
    %c0_62 = arith.constant 0 : index
    %149 = vector.load %arg9[%148, %c0_61, %c0_62] : memref<16x8x16xf32, #tpu.memory_space<vmem>>, vector<1x8x16xf32>
    %150 = vector.shape_cast %149 : vector<1x8x16xf32> to vector<8x16xf32>
    %151 = vector.shape_cast %147 : vector<8x16xf32> to vector<1x8x16xf32>
    tpu.vector_store %arg9[%148, %c0_61, %c0_62], %151 {strides = array<i32>} : memref<16x8x16xf32, #tpu.memory_space<vmem>>, vector<1x8x16xf32>,
    %c6_i32 = arith.constant 6 : i32
    %c8_i32_63 = arith.constant 8 : i32
    %152 = arith.muli %c6_i32, %c8_i32_63 : i32
    %153 = tpu.assume_multiple %152, 8 : i32
    %154 = arith.index_cast %153 : i32 to index
    %c0_64 = arith.constant 0 : index
    %155 = vector.load %arg8[%154, %c0_64] : memref<128x16xf32, #tpu.memory_space<vmem>>, vector<8x16xf32>
    %156 = arith.mulf %141, %13 : vector<8x16xf32>
    %157 = arith.addf %156, %155 : vector<8x16xf32>
    %cst_65 = arith.constant 1.000000e+00 : f32
    %158 = vector.broadcast %cst_65 : f32 to vector<8x16xf32>
    %159 = arith.mulf %158, %147 : vector<8x16xf32>
    %160 = arith.subf %157, %159 : vector<8x16xf32>
    %cst_66 = arith.constant 1.000000e+00 : f32
    %161 = vector.broadcast %cst_66 : f32 to vector<8x16xf32>
    %162 = arith.subf %160, %161 : vector<8x16xf32>
    %cst_67 = arith.constant 0.000000e+00 : f32
    %163 = vector.broadcast %cst_67 : f32 to vector<8x16xf32>
    %164 = arith.cmpf ogt, %162, %163 : vector<8x16xf32>
    %165 = arith.extui %164 : vector<8x16xi1> to vector<8x16xi32>
    %166 = arith.sitofp %165 : vector<8x16xi32> to vector<8x16xf32>
    %167 = arith.index_cast %c6_i32 : i32 to index
    %c0_68 = arith.constant 0 : index
    %c0_69 = arith.constant 0 : index
    %168 = vector.load %arg9[%167, %c0_68, %c0_69] : memref<16x8x16xf32, #tpu.memory_space<vmem>>, vector<1x8x16xf32>
    %169 = vector.shape_cast %168 : vector<1x8x16xf32> to vector<8x16xf32>
    %170 = vector.shape_cast %166 : vector<8x16xf32> to vector<1x8x16xf32>
    tpu.vector_store %arg9[%167, %c0_68, %c0_69], %170 {strides = array<i32>} : memref<16x8x16xf32, #tpu.memory_space<vmem>>, vector<1x8x16xf32>,
    %c7_i32 = arith.constant 7 : i32
    %c8_i32_70 = arith.constant 8 : i32
    %171 = arith.muli %c7_i32, %c8_i32_70 : i32
    %172 = tpu.assume_multiple %171, 8 : i32
    %173 = arith.index_cast %172 : i32 to index
    %c0_71 = arith.constant 0 : index
    %174 = vector.load %arg8[%173, %c0_71] : memref<128x16xf32, #tpu.memory_space<vmem>>, vector<8x16xf32>
    %175 = arith.mulf %160, %13 : vector<8x16xf32>
    %176 = arith.addf %175, %174 : vector<8x16xf32>
    %cst_72 = arith.constant 1.000000e+00 : f32
    %177 = vector.broadcast %cst_72 : f32 to vector<8x16xf32>
    %178 = arith.mulf %177, %166 : vector<8x16xf32>
    %179 = arith.subf %176, %178 : vector<8x16xf32>
    %cst_73 = arith.constant 1.000000e+00 : f32
    %180 = vector.broadcast %cst_73 : f32 to vector<8x16xf32>
    %181 = arith.subf %179, %180 : vector<8x16xf32>
    %cst_74 = arith.constant 0.000000e+00 : f32
    %182 = vector.broadcast %cst_74 : f32 to vector<8x16xf32>
    %183 = arith.cmpf ogt, %181, %182 : vector<8x16xf32>
    %184 = arith.extui %183 : vector<8x16xi1> to vector<8x16xi32>
    %185 = arith.sitofp %184 : vector<8x16xi32> to vector<8x16xf32>
    %186 = arith.index_cast %c7_i32 : i32 to index
    %c0_75 = arith.constant 0 : index
    %c0_76 = arith.constant 0 : index
    %187 = vector.load %arg9[%186, %c0_75, %c0_76] : memref<16x8x16xf32, #tpu.memory_space<vmem>>, vector<1x8x16xf32>
    %188 = vector.shape_cast %187 : vector<1x8x16xf32> to vector<8x16xf32>
    %189 = vector.shape_cast %185 : vector<8x16xf32> to vector<1x8x16xf32>
    tpu.vector_store %arg9[%186, %c0_75, %c0_76], %189 {strides = array<i32>} : memref<16x8x16xf32, #tpu.memory_space<vmem>>, vector<1x8x16xf32>,
    %c8_i32_77 = arith.constant 8 : i32
    %c8_i32_78 = arith.constant 8 : i32
    %190 = arith.muli %c8_i32_77, %c8_i32_78 : i32
    %191 = tpu.assume_multiple %190, 8 : i32
    %192 = arith.index_cast %191 : i32 to index
    %c0_79 = arith.constant 0 : index
    %193 = vector.load %arg8[%192, %c0_79] : memref<128x16xf32, #tpu.memory_space<vmem>>, vector<8x16xf32>
    %194 = arith.mulf %179, %13 : vector<8x16xf32>
    %195 = arith.addf %194, %193 : vector<8x16xf32>
    %cst_80 = arith.constant 1.000000e+00 : f32
    %196 = vector.broadcast %cst_80 : f32 to vector<8x16xf32>
    %197 = arith.mulf %196, %185 : vector<8x16xf32>
    %198 = arith.subf %195, %197 : vector<8x16xf32>
    %cst_81 = arith.constant 1.000000e+00 : f32
    %199 = vector.broadcast %cst_81 : f32 to vector<8x16xf32>
    %200 = arith.subf %198, %199 : vector<8x16xf32>
    %cst_82 = arith.constant 0.000000e+00 : f32
    %201 = vector.broadcast %cst_82 : f32 to vector<8x16xf32>
    %202 = arith.cmpf ogt, %200, %201 : vector<8x16xf32>
    %203 = arith.extui %202 : vector<8x16xi1> to vector<8x16xi32>
    %204 = arith.sitofp %203 : vector<8x16xi32> to vector<8x16xf32>
    %205 = arith.index_cast %c8_i32_77 : i32 to index
    %c0_83 = arith.constant 0 : index
    %c0_84 = arith.constant 0 : index
    %206 = vector.load %arg9[%205, %c0_83, %c0_84] : memref<16x8x16xf32, #tpu.memory_space<vmem>>, vector<1x8x16xf32>
    %207 = vector.shape_cast %206 : vector<1x8x16xf32> to vector<8x16xf32>
    %208 = vector.shape_cast %204 : vector<8x16xf32> to vector<1x8x16xf32>
    tpu.vector_store %arg9[%205, %c0_83, %c0_84], %208 {strides = array<i32>} : memref<16x8x16xf32, #tpu.memory_space<vmem>>, vector<1x8x16xf32>,
    %c9_i32 = arith.constant 9 : i32
    %c8_i32_85 = arith.constant 8 : i32
    %209 = arith.muli %c9_i32, %c8_i32_85 : i32
    %210 = tpu.assume_multiple %209, 8 : i32
    %211 = arith.index_cast %210 : i32 to index
    %c0_86 = arith.constant 0 : index
    %212 = vector.load %arg8[%211, %c0_86] : memref<128x16xf32, #tpu.memory_space<vmem>>, vector<8x16xf32>
    %213 = arith.mulf %198, %13 : vector<8x16xf32>
    %214 = arith.addf %213, %212 : vector<8x16xf32>
    %cst_87 = arith.constant 1.000000e+00 : f32
    %215 = vector.broadcast %cst_87 : f32 to vector<8x16xf32>
    %216 = arith.mulf %215, %204 : vector<8x16xf32>
    %217 = arith.subf %214, %216 : vector<8x16xf32>
    %cst_88 = arith.constant 1.000000e+00 : f32
    %218 = vector.broadcast %cst_88 : f32 to vector<8x16xf32>
    %219 = arith.subf %217, %218 : vector<8x16xf32>
    %cst_89 = arith.constant 0.000000e+00 : f32
    %220 = vector.broadcast %cst_89 : f32 to vector<8x16xf32>
    %221 = arith.cmpf ogt, %219, %220 : vector<8x16xf32>
    %222 = arith.extui %221 : vector<8x16xi1> to vector<8x16xi32>
    %223 = arith.sitofp %222 : vector<8x16xi32> to vector<8x16xf32>
    %224 = arith.index_cast %c9_i32 : i32 to index
    %c0_90 = arith.constant 0 : index
    %c0_91 = arith.constant 0 : index
    %225 = vector.load %arg9[%224, %c0_90, %c0_91] : memref<16x8x16xf32, #tpu.memory_space<vmem>>, vector<1x8x16xf32>
    %226 = vector.shape_cast %225 : vector<1x8x16xf32> to vector<8x16xf32>
    %227 = vector.shape_cast %223 : vector<8x16xf32> to vector<1x8x16xf32>
    tpu.vector_store %arg9[%224, %c0_90, %c0_91], %227 {strides = array<i32>} : memref<16x8x16xf32, #tpu.memory_space<vmem>>, vector<1x8x16xf32>,
    %c10_i32 = arith.constant 10 : i32
    %c8_i32_92 = arith.constant 8 : i32
    %228 = arith.muli %c10_i32, %c8_i32_92 : i32
    %229 = tpu.assume_multiple %228, 8 : i32
    %230 = arith.index_cast %229 : i32 to index
    %c0_93 = arith.constant 0 : index
    %231 = vector.load %arg8[%230, %c0_93] : memref<128x16xf32, #tpu.memory_space<vmem>>, vector<8x16xf32>
    %232 = arith.mulf %217, %13 : vector<8x16xf32>
    %233 = arith.addf %232, %231 : vector<8x16xf32>
    %cst_94 = arith.constant 1.000000e+00 : f32
    %234 = vector.broadcast %cst_94 : f32 to vector<8x16xf32>
    %235 = arith.mulf %234, %223 : vector<8x16xf32>
    %236 = arith.subf %233, %235 : vector<8x16xf32>
    %cst_95 = arith.constant 1.000000e+00 : f32
    %237 = vector.broadcast %cst_95 : f32 to vector<8x16xf32>
    %238 = arith.subf %236, %237 : vector<8x16xf32>
    %cst_96 = arith.constant 0.000000e+00 : f32
    %239 = vector.broadcast %cst_96 : f32 to vector<8x16xf32>
    %240 = arith.cmpf ogt, %238, %239 : vector<8x16xf32>
    %241 = arith.extui %240 : vector<8x16xi1> to vector<8x16xi32>
    %242 = arith.sitofp %241 : vector<8x16xi32> to vector<8x16xf32>
    %243 = arith.index_cast %c10_i32 : i32 to index
    %c0_97 = arith.constant 0 : index
    %c0_98 = arith.constant 0 : index
    %244 = vector.load %arg9[%243, %c0_97, %c0_98] : memref<16x8x16xf32, #tpu.memory_space<vmem>>, vector<1x8x16xf32>
    %245 = vector.shape_cast %244 : vector<1x8x16xf32> to vector<8x16xf32>
    %246 = vector.shape_cast %242 : vector<8x16xf32> to vector<1x8x16xf32>
    tpu.vector_store %arg9[%243, %c0_97, %c0_98], %246 {strides = array<i32>} : memref<16x8x16xf32, #tpu.memory_space<vmem>>, vector<1x8x16xf32>,
    %c11_i32 = arith.constant 11 : i32
    %c8_i32_99 = arith.constant 8 : i32
    %247 = arith.muli %c11_i32, %c8_i32_99 : i32
    %248 = tpu.assume_multiple %247, 8 : i32
    %249 = arith.index_cast %248 : i32 to index
    %c0_100 = arith.constant 0 : index
    %250 = vector.load %arg8[%249, %c0_100] : memref<128x16xf32, #tpu.memory_space<vmem>>, vector<8x16xf32>
    %251 = arith.mulf %236, %13 : vector<8x16xf32>
    %252 = arith.addf %251, %250 : vector<8x16xf32>
    %cst_101 = arith.constant 1.000000e+00 : f32
    %253 = vector.broadcast %cst_101 : f32 to vector<8x16xf32>
    %254 = arith.mulf %253, %242 : vector<8x16xf32>
    %255 = arith.subf %252, %254 : vector<8x16xf32>
    %cst_102 = arith.constant 1.000000e+00 : f32
    %256 = vector.broadcast %cst_102 : f32 to vector<8x16xf32>
    %257 = arith.subf %255, %256 : vector<8x16xf32>
    %cst_103 = arith.constant 0.000000e+00 : f32
    %258 = vector.broadcast %cst_103 : f32 to vector<8x16xf32>
    %259 = arith.cmpf ogt, %257, %258 : vector<8x16xf32>
    %260 = arith.extui %259 : vector<8x16xi1> to vector<8x16xi32>
    %261 = arith.sitofp %260 : vector<8x16xi32> to vector<8x16xf32>
    %262 = arith.index_cast %c11_i32 : i32 to index
    %c0_104 = arith.constant 0 : index
    %c0_105 = arith.constant 0 : index
    %263 = vector.load %arg9[%262, %c0_104, %c0_105] : memref<16x8x16xf32, #tpu.memory_space<vmem>>, vector<1x8x16xf32>
    %264 = vector.shape_cast %263 : vector<1x8x16xf32> to vector<8x16xf32>
    %265 = vector.shape_cast %261 : vector<8x16xf32> to vector<1x8x16xf32>
    tpu.vector_store %arg9[%262, %c0_104, %c0_105], %265 {strides = array<i32>} : memref<16x8x16xf32, #tpu.memory_space<vmem>>, vector<1x8x16xf32>,
    %c12_i32 = arith.constant 12 : i32
    %c8_i32_106 = arith.constant 8 : i32
    %266 = arith.muli %c12_i32, %c8_i32_106 : i32
    %267 = tpu.assume_multiple %266, 8 : i32
    %268 = arith.index_cast %267 : i32 to index
    %c0_107 = arith.constant 0 : index
    %269 = vector.load %arg8[%268, %c0_107] : memref<128x16xf32, #tpu.memory_space<vmem>>, vector<8x16xf32>
    %270 = arith.mulf %255, %13 : vector<8x16xf32>
    %271 = arith.addf %270, %269 : vector<8x16xf32>
    %cst_108 = arith.constant 1.000000e+00 : f32
    %272 = vector.broadcast %cst_108 : f32 to vector<8x16xf32>
    %273 = arith.mulf %272, %261 : vector<8x16xf32>
    %274 = arith.subf %271, %273 : vector<8x16xf32>
    %cst_109 = arith.constant 1.000000e+00 : f32
    %275 = vector.broadcast %cst_109 : f32 to vector<8x16xf32>
    %276 = arith.subf %274, %275 : vector<8x16xf32>
    %cst_110 = arith.constant 0.000000e+00 : f32
    %277 = vector.broadcast %cst_110 : f32 to vector<8x16xf32>
    %278 = arith.cmpf ogt, %276, %277 : vector<8x16xf32>
    %279 = arith.extui %278 : vector<8x16xi1> to vector<8x16xi32>
    %280 = arith.sitofp %279 : vector<8x16xi32> to vector<8x16xf32>
    %281 = arith.index_cast %c12_i32 : i32 to index
    %c0_111 = arith.constant 0 : index
    %c0_112 = arith.constant 0 : index
    %282 = vector.load %arg9[%281, %c0_111, %c0_112] : memref<16x8x16xf32, #tpu.memory_space<vmem>>, vector<1x8x16xf32>
    %283 = vector.shape_cast %282 : vector<1x8x16xf32> to vector<8x16xf32>
    %284 = vector.shape_cast %280 : vector<8x16xf32> to vector<1x8x16xf32>
    tpu.vector_store %arg9[%281, %c0_111, %c0_112], %284 {strides = array<i32>} : memref<16x8x16xf32, #tpu.memory_space<vmem>>, vector<1x8x16xf32>,
    %c13_i32 = arith.constant 13 : i32
    %c8_i32_113 = arith.constant 8 : i32
    %285 = arith.muli %c13_i32, %c8_i32_113 : i32
    %286 = tpu.assume_multiple %285, 8 : i32
    %287 = arith.index_cast %286 : i32 to index
    %c0_114 = arith.constant 0 : index
    %288 = vector.load %arg8[%287, %c0_114] : memref<128x16xf32, #tpu.memory_space<vmem>>, vector<8x16xf32>
    %289 = arith.mulf %274, %13 : vector<8x16xf32>
    %290 = arith.addf %289, %288 : vector<8x16xf32>
    %cst_115 = arith.constant 1.000000e+00 : f32
    %291 = vector.broadcast %cst_115 : f32 to vector<8x16xf32>
    %292 = arith.mulf %291, %280 : vector<8x16xf32>
    %293 = arith.subf %290, %292 : vector<8x16xf32>
    %cst_116 = arith.constant 1.000000e+00 : f32
    %294 = vector.broadcast %cst_116 : f32 to vector<8x16xf32>
    %295 = arith.subf %293, %294 : vector<8x16xf32>
    %cst_117 = arith.constant 0.000000e+00 : f32
    %296 = vector.broadcast %cst_117 : f32 to vector<8x16xf32>
    %297 = arith.cmpf ogt, %295, %296 : vector<8x16xf32>
    %298 = arith.extui %297 : vector<8x16xi1> to vector<8x16xi32>
    %299 = arith.sitofp %298 : vector<8x16xi32> to vector<8x16xf32>
    %300 = arith.index_cast %c13_i32 : i32 to index
    %c0_118 = arith.constant 0 : index
    %c0_119 = arith.constant 0 : index
    %301 = vector.load %arg9[%300, %c0_118, %c0_119] : memref<16x8x16xf32, #tpu.memory_space<vmem>>, vector<1x8x16xf32>
    %302 = vector.shape_cast %301 : vector<1x8x16xf32> to vector<8x16xf32>
    %303 = vector.shape_cast %299 : vector<8x16xf32> to vector<1x8x16xf32>
    tpu.vector_store %arg9[%300, %c0_118, %c0_119], %303 {strides = array<i32>} : memref<16x8x16xf32, #tpu.memory_space<vmem>>, vector<1x8x16xf32>,
    %c14_i32 = arith.constant 14 : i32
    %c8_i32_120 = arith.constant 8 : i32
    %304 = arith.muli %c14_i32, %c8_i32_120 : i32
    %305 = tpu.assume_multiple %304, 8 : i32
    %306 = arith.index_cast %305 : i32 to index
    %c0_121 = arith.constant 0 : index
    %307 = vector.load %arg8[%306, %c0_121] : memref<128x16xf32, #tpu.memory_space<vmem>>, vector<8x16xf32>
    %308 = arith.mulf %293, %13 : vector<8x16xf32>
    %309 = arith.addf %308, %307 : vector<8x16xf32>
    %cst_122 = arith.constant 1.000000e+00 : f32
    %310 = vector.broadcast %cst_122 : f32 to vector<8x16xf32>
    %311 = arith.mulf %310, %299 : vector<8x16xf32>
    %312 = arith.subf %309, %311 : vector<8x16xf32>
    %cst_123 = arith.constant 1.000000e+00 : f32
    %313 = vector.broadcast %cst_123 : f32 to vector<8x16xf32>
    %314 = arith.subf %312, %313 : vector<8x16xf32>
    %cst_124 = arith.constant 0.000000e+00 : f32
    %315 = vector.broadcast %cst_124 : f32 to vector<8x16xf32>
    %316 = arith.cmpf ogt, %314, %315 : vector<8x16xf32>
    %317 = arith.extui %316 : vector<8x16xi1> to vector<8x16xi32>
    %318 = arith.sitofp %317 : vector<8x16xi32> to vector<8x16xf32>
    %319 = arith.index_cast %c14_i32 : i32 to index
    %c0_125 = arith.constant 0 : index
    %c0_126 = arith.constant 0 : index
    %320 = vector.load %arg9[%319, %c0_125, %c0_126] : memref<16x8x16xf32, #tpu.memory_space<vmem>>, vector<1x8x16xf32>
    %321 = vector.shape_cast %320 : vector<1x8x16xf32> to vector<8x16xf32>
    %322 = vector.shape_cast %318 : vector<8x16xf32> to vector<1x8x16xf32>
    tpu.vector_store %arg9[%319, %c0_125, %c0_126], %322 {strides = array<i32>} : memref<16x8x16xf32, #tpu.memory_space<vmem>>, vector<1x8x16xf32>,
    %c15_i32 = arith.constant 15 : i32
    %c8_i32_127 = arith.constant 8 : i32
    %323 = arith.muli %c15_i32, %c8_i32_127 : i32
    %324 = tpu.assume_multiple %323, 8 : i32
    %325 = arith.index_cast %324 : i32 to index
    %c0_128 = arith.constant 0 : index
    %326 = vector.load %arg8[%325, %c0_128] : memref<128x16xf32, #tpu.memory_space<vmem>>, vector<8x16xf32>
    %327 = arith.mulf %312, %13 : vector<8x16xf32>
    %328 = arith.addf %327, %326 : vector<8x16xf32>
    %cst_129 = arith.constant 1.000000e+00 : f32
    %329 = vector.broadcast %cst_129 : f32 to vector<8x16xf32>
    %330 = arith.mulf %329, %318 : vector<8x16xf32>
    %331 = arith.subf %328, %330 : vector<8x16xf32>
    %cst_130 = arith.constant 1.000000e+00 : f32
    %332 = vector.broadcast %cst_130 : f32 to vector<8x16xf32>
    %333 = arith.subf %331, %332 : vector<8x16xf32>
    %cst_131 = arith.constant 0.000000e+00 : f32
    %334 = vector.broadcast %cst_131 : f32 to vector<8x16xf32>
    %335 = arith.cmpf ogt, %333, %334 : vector<8x16xf32>
    %336 = arith.extui %335 : vector<8x16xi1> to vector<8x16xi32>
    %337 = arith.sitofp %336 : vector<8x16xi32> to vector<8x16xf32>
    %338 = arith.index_cast %c15_i32 : i32 to index
    %c0_132 = arith.constant 0 : index
    %c0_133 = arith.constant 0 : index
    %339 = vector.load %arg9[%338, %c0_132, %c0_133] : memref<16x8x16xf32, #tpu.memory_space<vmem>>, vector<1x8x16xf32>
    %340 = vector.shape_cast %339 : vector<1x8x16xf32> to vector<8x16xf32>
    %341 = vector.shape_cast %337 : vector<8x16xf32> to vector<1x8x16xf32>
    tpu.vector_store %arg9[%338, %c0_132, %c0_133], %341 {strides = array<i32>} : memref<16x8x16xf32, #tpu.memory_space<vmem>>, vector<1x8x16xf32>,
    %c16_i32 = arith.constant 16 : i32
    %c0_134 = arith.constant 0 : index
    %c0_135 = arith.constant 0 : index
    %c0_136 = arith.constant 0 : index
    %342 = vector.load %arg9[%c0_134, %c0_135, %c0_136] : memref<16x8x16xf32, #tpu.memory_space<vmem>>, vector<16x8x16xf32>
    %343 = tpu.iota {dimensions = array<i32: 0>} : vector<16x16xi32>
    %344 = tpu.iota {dimensions = array<i32: 1>} : vector<16x16xi32>
    %345 = arith.subi %343, %344 : vector<16x16xi32>
    %346 = arith.sitofp %345 : vector<16x16xi32> to vector<16x16xf32>
    %cst_137 = arith.constant 0.000000e+00 : f32
    %347 = vector.broadcast %cst_137 : f32 to vector<16x16xf32>
    %348 = arith.maximumf %346, %347 : vector<16x16xf32>
    %349 = arith.cmpi sge, %343, %344 : vector<16x16xi32>
    %350 = vector.extract_strided_slice %11 {offsets = [0, 0], sizes = [1, 1], strides = [1, 1]} : vector<2x1xf32> to vector<1x1xf32>
    %cst_138 = arith.constant 1.000000e-30 : f32
    %351 = vector.broadcast %cst_138 : f32 to vector<1x1xf32>
    %352 = arith.maximumf %350, %351 : vector<1x1xf32>
    %353 = vector.extract_strided_slice %27 {offsets = [0, 0], sizes = [1, 16], strides = [1, 1]} : vector<2x16xf32> to vector<1x16xf32>
    %354 = vector.extract_strided_slice %31 {offsets = [0, 0], sizes = [1, 1], strides = [1, 1]} : vector<2x1xf32> to vector<1x1xf32>
    %355 = vector.shape_cast %353 : vector<1x16xf32> to vector<1x1x16xf32>
    %356 = vector.broadcast %355 : vector<1x1x16xf32> to vector<16x8x16xf32>
    %357 = arith.mulf %342, %356 : vector<16x8x16xf32>
    %cst_139 = arith.constant dense<0.000000e+00> : vector<16x8xf32>
    %358 = vector.multi_reduction <add>, %357, %cst_139 [2] : vector<16x8x16xf32> to vector<16x8xf32>
    %359 = vector.broadcast %354 : vector<1x1xf32> to vector<16x8xf32>
    %360 = arith.addf %358, %359 : vector<16x8xf32>
    %361 = math.log %352 : vector<1x1xf32>
    %362 = vector.broadcast %361 : vector<1x1xf32> to vector<16x16xf32>
    %363 = arith.mulf %348, %362 : vector<16x16xf32>
    %364 = math.exp %363 : vector<16x16xf32>
    %cst_140 = arith.constant 0.000000e+00 : f32
    %365 = vector.broadcast %cst_140 : f32 to vector<16x16xf32>
    %366 = arith.select %349, %364, %365 : vector<16x16xi1>, vector<16x16xf32>
    %cst_141 = arith.constant dense<0.000000e+00> : vector<16x8xf32>
    %367 = tpu.matmul %366, %360, %cst_141 {dimension_numbers = #tpu.dot_dimension_numbers<[1], [0], [0], [1], [0, 0, 1, 1], [], []>} : vector<16x16xf32>, vector<16x8xf32>, vector<16x8xf32> -> vector<16x8xf32>
    %c0_142 = arith.constant 0 : index
    %c0_143 = arith.constant 0 : index
    %c0_144 = arith.constant 0 : index
    %368 = vector.load %arg7[%c0_142, %c0_143, %c0_144] : memref<2x16x8xf32, #tpu.memory_space<vmem>>, vector<1x16x8xf32>
    %369 = vector.shape_cast %368 : vector<1x16x8xf32> to vector<16x8xf32>
    %370 = vector.shape_cast %367 : vector<16x8xf32> to vector<1x16x8xf32>
    tpu.vector_store %arg7[%c0_142, %c0_143, %c0_144], %370 {strides = array<i32>} : memref<2x16x8xf32, #tpu.memory_space<vmem>>, vector<1x16x8xf32>,
    %371 = vector.extract_strided_slice %11 {offsets = [1, 0], sizes = [1, 1], strides = [1, 1]} : vector<2x1xf32> to vector<1x1xf32>
    %cst_145 = arith.constant 1.000000e-30 : f32
    %372 = vector.broadcast %cst_145 : f32 to vector<1x1xf32>
    %373 = arith.maximumf %371, %372 : vector<1x1xf32>
    %374 = vector.extract_strided_slice %27 {offsets = [1, 0], sizes = [1, 16], strides = [1, 1]} : vector<2x16xf32> to vector<1x16xf32>
    %375 = vector.extract_strided_slice %31 {offsets = [1, 0], sizes = [1, 1], strides = [1, 1]} : vector<2x1xf32> to vector<1x1xf32>
    %376 = vector.shape_cast %374 : vector<1x16xf32> to vector<1x1x16xf32>
    %377 = vector.broadcast %376 : vector<1x1x16xf32> to vector<16x8x16xf32>
    %378 = arith.mulf %342, %377 : vector<16x8x16xf32>
    %cst_146 = arith.constant dense<0.000000e+00> : vector<16x8xf32>
    %379 = vector.multi_reduction <add>, %378, %cst_146 [2] : vector<16x8x16xf32> to vector<16x8xf32>
    %380 = vector.broadcast %375 : vector<1x1xf32> to vector<16x8xf32>
    %381 = arith.addf %379, %380 : vector<16x8xf32>
    %382 = math.log %373 : vector<1x1xf32>
    %383 = vector.broadcast %382 : vector<1x1xf32> to vector<16x16xf32>
    %384 = arith.mulf %348, %383 : vector<16x16xf32>
    %385 = math.exp %384 : vector<16x16xf32>
    %cst_147 = arith.constant 0.000000e+00 : f32
    %386 = vector.broadcast %cst_147 : f32 to vector<16x16xf32>
    %387 = arith.select %349, %385, %386 : vector<16x16xi1>, vector<16x16xf32>
    %cst_148 = arith.constant dense<0.000000e+00> : vector<16x8xf32>
    %388 = tpu.matmul %387, %381, %cst_148 {dimension_numbers = #tpu.dot_dimension_numbers<[1], [0], [0], [1], [0, 0, 1, 1], [], []>} : vector<16x16xf32>, vector<16x8xf32>, vector<16x8xf32> -> vector<16x8xf32>
    %c1 = arith.constant 1 : index
    %c0_149 = arith.constant 0 : index
    %c0_150 = arith.constant 0 : index
    %389 = vector.load %arg7[%c1, %c0_149, %c0_150] : memref<2x16x8xf32, #tpu.memory_space<vmem>>, vector<1x16x8xf32>
    %390 = vector.shape_cast %389 : vector<1x16x8xf32> to vector<16x8xf32>
    %391 = vector.shape_cast %388 : vector<16x8xf32> to vector<1x16x8xf32>
    tpu.vector_store %arg7[%c1, %c0_149, %c0_150], %391 {strides = array<i32>} : memref<2x16x8xf32, #tpu.memory_space<vmem>>, vector<1x16x8xf32>,
    return
  }
}

</mosaic_0001>

<llo_original>
// kernel: dense_vanilla_forward.1
$region0: #{dense_vanilla_forward.1}
  #allocation0 [shape = 'u32[]', space=smem, size = 0x4, offset = 0x4, fixed_abs, tag = 'smem constant byte address 0x4 - core index']
  #allocation1 [shape = 'u32[144,128]{1,0:T(1,128)}', space=vmem, size = 0x12000, scoped, tag = 'internal scratch']
  #allocation2 [shape = 'f32[128,16]{1,0:T(8,128)}', space=vmem, size = 0x10000, scoped, tag = 'scratch operand']
  #allocation3 [shape = 'f32[16,8,16]{2,1,0:T(8,128)}', space=vmem, size = 0x10000, scoped, tag = 'scratch operand']
  %s0 = inlined_call_operand.vmem [shape: f32[128,4], index: 0, kind: input, shape index: {}]
  %s1 = inlined_call_operand.vmem [shape: f32[4,16], index: 1, kind: input, shape index: {}]
  %s2 = inlined_call_operand.vmem [shape: f32[1,16], index: 2, kind: input, shape index: {}]
  %s3 = inlined_call_operand.vmem [shape: f32[1,16], index: 3, kind: input, shape index: {}]
  %s4 = inlined_call_operand.vmem [shape: f32[2,16], index: 4, kind: input, shape index: {}]
  %s5 = inlined_call_operand.vmem [shape: f32[2,1], index: 5, kind: input, shape index: {}]
  %s6 = inlined_call_operand.vmem [shape: f32[2,1], index: 6, kind: input, shape index: {}]
  %s7 = inlined_call_operand.vmem [shape: f32[2,16,8], index: 7, kind: output, shape index: {}]
  %s8 = sld [smem:[#allocation0]]
  $region38: #{dense_vanilla_forward.1} parent=0
    _
  %s10 = ssub.s32 1, %s8
  %s11 = scalar_select 0, %s10, %s8
  // Predicated region
  $region2: #{dense_vanilla_forward.1} parent=0 // pred_check
    _
  $region3: #{dense_vanilla_forward.1} parent=0 // pred_check_branch
    %13 = sbr.rel (0) target = $region5
  $region4: #{dense_vanilla_forward.1} parent=0 // pred_region
    _
  $region5: #{dense_vanilla_forward.1} parent=0 // pred_fallthru
    _
  // Predicated region
  $region6: #{dense_vanilla_forward.1} parent=0 // pred_check
    _
  $region7: #{dense_vanilla_forward.1} parent=0 // pred_check_branch
    %15 = sbr.rel (0) target = $region9
  $region8: #{dense_vanilla_forward.1} parent=0 // pred_region
    _
  $region9: #{dense_vanilla_forward.1} parent=0 // pred_fallthru
    _
  // Predicated region
  $region10: #{dense_vanilla_forward.1} parent=0 // pred_check
    _
  $region11: #{dense_vanilla_forward.1} parent=0 // pred_check_branch
    %17 = sbr.rel (0) target = $region13
  $region12: #{dense_vanilla_forward.1} parent=0 // pred_region
    _
  $region13: #{dense_vanilla_forward.1} parent=0 // pred_fallthru
    _
  // Predicated region
  $region14: #{dense_vanilla_forward.1} parent=0 // pred_check
    _
  $region15: #{dense_vanilla_forward.1} parent=0 // pred_check_branch
    %19 = sbr.rel (0) target = $region17
  $region16: #{dense_vanilla_forward.1} parent=0 // pred_region
    _
  $region17: #{dense_vanilla_forward.1} parent=0 // pred_fallthru
    _
  // Predicated region
  $region18: #{dense_vanilla_forward.1} parent=0 // pred_check
    _
  $region19: #{dense_vanilla_forward.1} parent=0 // pred_check_branch
    %21 = sbr.rel (0) target = $region21
  $region20: #{dense_vanilla_forward.1} parent=0 // pred_region
    _
  $region21: #{dense_vanilla_forward.1} parent=0 // pred_fallthru
    _
  // Predicated region
  $region22: #{dense_vanilla_forward.1} parent=0 // pred_check
    _
  $region23: #{dense_vanilla_forward.1} parent=0 // pred_check_branch
    %23 = sbr.rel (0) target = $region25
  $region24: #{dense_vanilla_forward.1} parent=0 // pred_region
    _
  $region25: #{dense_vanilla_forward.1} parent=0 // pred_fallthru
    _
  // Predicated region
  $region26: #{dense_vanilla_forward.1} parent=0 // pred_check
    _
  $region27: #{dense_vanilla_forward.1} parent=0 // pred_check_branch
    %25 = sbr.rel (0) target = $region29
  $region28: #{dense_vanilla_forward.1} parent=0 // pred_region
    _
  $region29: #{dense_vanilla_forward.1} parent=0 // pred_fallthru
    _
  %v26 = vld [vmem:[%s3] sm:$0x1]
  %v27 = vxor.u32 %v26, 2147483648
  %v28 = vmul.f32 %v27, 1.442695
  %v29 = vpow.pop %v28
  %v30 = vadd.f32 %v29, 1.0
  %v31 = vrcp.pop %v30
  %v32 = vmul.f32 1.0, %v31
  %v33 = vld [vmem:[%s6] sm:$0x3]
  %v34 = vxor.u32 %v33, 2147483648
  %v35 = vmul.f32 %v34, 1.442695
  %v36 = vpow.pop %v35
  %v37 = vadd.f32 %v36, 1.0
  %v38 = vrcp.pop %v37
  %v39 = vmul.f32 1.0, %v38
  %v41 = vlaneseq
  %v42 = vshrl.u32 %v41, 7
  %v43 = vsub.s32 0, %v42
  %v44 = vrot.slane %v32, %v43
  %v46 = vsub.f32 1.0, %v32
  %v47 = vld [vmem:[%s1] sm:$0xf]
  %v49 = vlaneseq
  %v50 = vshrl.u32 %v49, 7
  %v51 = vsub.s32 0, %v50
  %v52 = vrot.slane %v46, %v51
  %v54 = vmul.f32 %v47, %v52
  %v55 = vld [vmem:[%s2] sm:$0x1]
  %v56 = vmul.f32 %v55, %v46
  %v57 = vld [vmem:[%s4] sm:$0x3]
  %v58 = vsub.f32 1.0, %v39
  %60 = vset.pattern.permute.xlu0 0
  %61 = vperm.xlu0 %60, %v58
  %v62 = vpop.permute.xlu0 %61
  %v64 = vmul.f32 %v57, %v62
  %v65 = vld [vmem:[%s5] sm:$0x3]
  %v66 = vmul.f32 %v65, %v58
  %v67 = vld [vmem:[%s0] sm:$0xff]
  %v68 = vld [vmem:[%s0 + $0x8] sm:$0xff]
  %v69 = vld [vmem:[%s0 + $0x10] sm:$0xff]
  %v70 = vld [vmem:[%s0 + $0x18] sm:$0xff]
  %v71 = vld [vmem:[%s0 + $0x20] sm:$0xff]
  %v72 = vld [vmem:[%s0 + $0x28] sm:$0xff]
  %v73 = vld [vmem:[%s0 + $0x30] sm:$0xff]
  %v74 = vld [vmem:[%s0 + $0x38] sm:$0xff]
  %v75 = vld [vmem:[%s0 + $0x40] sm:$0xff]
  %v76 = vld [vmem:[%s0 + $0x48] sm:$0xff]
  %v77 = vld [vmem:[%s0 + $0x50] sm:$0xff]
  %v78 = vld [vmem:[%s0 + $0x58] sm:$0xff]
  %v79 = vld [vmem:[%s0 + $0x60] sm:$0xff]
  %v80 = vld [vmem:[%s0 + $0x68] sm:$0xff]
  %v81 = vld [vmem:[%s0 + $0x70] sm:$0xff]
  %v82 = vld [vmem:[%s0 + $0x78] sm:$0xff]
  %v84 = vlaneseq
  %v85 = vshrl.u32 %v84, 7
  %v86 = vsub.s32 0, %v85
  %v87 = vrot.slane %v56, %v86
  %vm89 = vcmask 31744
  %v91 = vsel %vm89, %v67, 0
  %v94 = vsel %vm89, %v68, 0
  %v97 = vsel %vm89, %v69, 0
  %v100 = vsel %vm89, %v70, 0
  %v103 = vsel %vm89, %v71, 0
  %v106 = vsel %vm89, %v72, 0
  %v109 = vsel %vm89, %v73, 0
  %v112 = vsel %vm89, %v74, 0
  %v115 = vsel %vm89, %v75, 0
  %v118 = vsel %vm89, %v76, 0
  %v121 = vsel %vm89, %v77, 0
  %v124 = vsel %vm89, %v78, 0
  %v127 = vsel %vm89, %v79, 0
  %v130 = vsel %vm89, %v80, 0
  %v133 = vsel %vm89, %v81, 0
  %v136 = vsel %vm89, %v82, 0
  %vm138 = vcmask 1043456
  %v140 = vsel %vm138, %v54, 0
  %142 = vmatprep.subr.mxu0 0.0
  %143 = vmatpush1.msra.mxu0 %v140
  %144 = vmatprep.subr.mxu0 0.0
  %145 = vmatpush1.msra.mxu0 0.0
  %146 = vmatprep.subr.mxu0 0.0
  %147 = vmatpush1.msra.mxu0 0.0
  %148 = vmatprep.subr.mxu0 0.0
  %149 = vmatpush1.msra.mxu0 0.0
  %150 = vmatprep.subr.mxu0 0.0
  %151 = vmatpush1.msra.mxu0 0.0
  %152 = vmatprep.subr.mxu0 0.0
  %153 = vmatpush1.msra.mxu0 0.0
  %154 = vmatprep.subr.mxu0 0.0
  %155 = vmatpush1.msra.mxu0 0.0
  %156 = vmatprep.subr.mxu0 0.0
  %157 = vmatpush1.msra.mxu0 0.0
  %158 = vmatprep.subr.mxu0 0.0
  %159 = vmatpush1.msra.mxu0 0.0
  %160 = vmatprep.subr.mxu0 0.0
  %161 = vmatpush1.msra.mxu0 0.0
  %162 = vmatprep.subr.mxu0 0.0
  %163 = vmatpush1.msra.mxu0 0.0
  %164 = vmatprep.subr.mxu0 0.0
  %165 = vmatpush1.msra.mxu0 0.0
  %166 = vmatprep.subr.mxu0 0.0
  %167 = vmatpush1.msra.mxu0 0.0
  %168 = vmatprep.subr.mxu0 0.0
  %169 = vmatpush1.msra.mxu0 0.0
  %170 = vmatprep.subr.mxu0 0.0
  %171 = vmatpush1.msra.mxu0 0.0
  %172 = vmatprep.subr.mxu0 0.0
  %173 = vmatpush1.msra.mxu0 0.0
  %174 = vmatprep.subr.mxu0 0.0
  %175 = vmatpush1.msra.mxu0 0.0
  %176 = vmatprep.subr.mxu0 0.0
  %177 = vmatpush1.msra.mxu0 0.0
  %178 = vmatprep.subr.mxu0 0.0
  %179 = vmatpush1.msra.mxu0 0.0
  %180 = vmatprep.subr.mxu0 0.0
  %181 = vmatpush1.msra.mxu0 0.0
  %182 = vmatprep.subr.mxu0 0.0
  %183 = vmatpush1.msra.mxu0 0.0
  %184 = vmatprep.subr.mxu0 0.0
  %185 = vmatpush1.msra.mxu0 0.0
  %186 = vmatprep.subr.mxu0 0.0
  %187 = vmatpush1.msra.mxu0 0.0
  %188 = vmatprep.subr.mxu0 0.0
  %189 = vmatpush1.msra.mxu0 0.0
  %190 = vmatprep.subr.mxu0 0.0
  %191 = vmatpush1.msra.mxu0 0.0
  %192 = vmatprep.subr.mxu0 0.0
  %193 = vmatpush1.msra.mxu0 0.0
  %194 = vmatprep.subr.mxu0 0.0
  %195 = vmatpush1.msra.mxu0 0.0
  %196 = vmatprep.subr.mxu0 0.0
  %197 = vmatpush1.msra.mxu0 0.0
  %198 = vmatprep.subr.mxu0 0.0
  %199 = vmatpush1.msra.mxu0 0.0
  %200 = vmatprep.subr.mxu0 0.0
  %201 = vmatpush1.msra.mxu0 0.0
  %202 = vmatprep.subr.mxu0 0.0
  %203 = vmatpush1.msra.mxu0 0.0
  %204 = vmatprep.subr.mxu0 0.0
  %205 = vmatpush1.msra.mxu0 0.0
  %206 = vmatprep.mubr.f32.mxu0 0.0
  %207 = vmatmul.mubr.f32.gmra.mrb[0].mxu0 %v91
  %v208 = vpop.f32.mrb[0].mxu0
  %v209 = vadd.f32 %v87, %v208
  %v210 = vpop.f32.mrb[0].mxu0
  %211 = vmatprep.mubr.f32.mxu0 0.0
  %212 = vmatmul.mubr.f32.gmra.mrb[0].mxu0 %v94
  %v213 = vpop.f32.mrb[0].mxu0
  %v214 = vadd.f32 %v87, %v213
  %v215 = vpop.f32.mrb[0].mxu0
  %216 = vmatprep.mubr.f32.mxu0 0.0
  %217 = vmatmul.mubr.f32.gmra.mrb[0].mxu0 %v97
  %v218 = vpop.f32.mrb[0].mxu0
  %v219 = vadd.f32 %v87, %v218
  %v220 = vpop.f32.mrb[0].mxu0
  %221 = vmatprep.mubr.f32.mxu0 0.0
  %222 = vmatmul.mubr.f32.gmra.mrb[0].mxu0 %v100
  %v223 = vpop.f32.mrb[0].mxu0
  %v224 = vadd.f32 %v87, %v223
  %v225 = vpop.f32.mrb[0].mxu0
  %226 = vmatprep.mubr.f32.mxu0 0.0
  %227 = vmatmul.mubr.f32.gmra.mrb[0].mxu0 %v103
  %v228 = vpop.f32.mrb[0].mxu0
  %v229 = vadd.f32 %v87, %v228
  %v230 = vpop.f32.mrb[0].mxu0
  %231 = vmatprep.mubr.f32.mxu0 0.0
  %232 = vmatmul.mubr.f32.gmra.mrb[0].mxu0 %v106
  %v233 = vpop.f32.mrb[0].mxu0
  %v234 = vadd.f32 %v87, %v233
  %v235 = vpop.f32.mrb[0].mxu0
  %236 = vmatprep.mubr.f32.mxu0 0.0
  %237 = vmatmul.mubr.f32.gmra.mrb[0].mxu0 %v109
  %v238 = vpop.f32.mrb[0].mxu0
  %v239 = vadd.f32 %v87, %v238
  %v240 = vpop.f32.mrb[0].mxu0
  %241 = vmatprep.mubr.f32.mxu0 0.0
  %242 = vmatmul.mubr.f32.gmra.mrb[0].mxu0 %v112
  %v243 = vpop.f32.mrb[0].mxu0
  %v244 = vadd.f32 %v87, %v243
  %v245 = vpop.f32.mrb[0].mxu0
  %246 = vmatprep.mubr.f32.mxu0 0.0
  %247 = vmatmul.mubr.f32.gmra.mrb[0].mxu0 %v115
  %v248 = vpop.f32.mrb[0].mxu0
  %v249 = vadd.f32 %v87, %v248
  %v250 = vpop.f32.mrb[0].mxu0
  %251 = vmatprep.mubr.f32.mxu0 0.0
  %252 = vmatmul.mubr.f32.gmra.mrb[0].mxu0 %v118
  %v253 = vpop.f32.mrb[0].mxu0
  %v254 = vadd.f32 %v87, %v253
  %v255 = vpop.f32.mrb[0].mxu0
  %256 = vmatprep.mubr.f32.mxu0 0.0
  %257 = vmatmul.mubr.f32.gmra.mrb[0].mxu0 %v121
  %v258 = vpop.f32.mrb[0].mxu0
  %v259 = vadd.f32 %v87, %v258
  %v260 = vpop.f32.mrb[0].mxu0
  %261 = vmatprep.mubr.f32.mxu0 0.0
  %262 = vmatmul.mubr.f32.gmra.mrb[0].mxu0 %v124
  %v263 = vpop.f32.mrb[0].mxu0
  %v264 = vadd.f32 %v87, %v263
  %v265 = vpop.f32.mrb[0].mxu0
  %266 = vmatprep.mubr.f32.mxu0 0.0
  %267 = vmatmul.mubr.f32.gmra.mrb[0].mxu0 %v127
  %v268 = vpop.f32.mrb[0].mxu0
  %v269 = vadd.f32 %v87, %v268
  %v270 = vpop.f32.mrb[0].mxu0
  %271 = vmatprep.mubr.f32.mxu0 0.0
  %272 = vmatmul.mubr.f32.gmra.mrb[0].mxu0 %v130
  %v273 = vpop.f32.mrb[0].mxu0
  %v274 = vadd.f32 %v87, %v273
  %v275 = vpop.f32.mrb[0].mxu0
  %276 = vmatprep.mubr.f32.mxu0 0.0
  %277 = vmatmul.mubr.f32.gmra.mrb[0].mxu0 %v133
  %v278 = vpop.f32.mrb[0].mxu0
  %v279 = vadd.f32 %v87, %v278
  %v280 = vpop.f32.mrb[0].mxu0
  %281 = vmatprep.mubr.f32.mxu0 0.0
  %282 = vmatmul.mubr.f32.gmra.mrb[0].mxu0 %v136
  %v283 = vpop.f32.mrb[0].mxu0
  %v284 = vadd.f32 %v87, %v283
  %v285 = vpop.f32.mrb[0].mxu0
  %286 = vdwg.mxu0
  %vm287 = vcmask 130048
  %288 = vst.msk [vmem:[#allocation2] sm:$0xff] %vm287, %v209
  %289 = vst.msk [vmem:[#allocation2 + $0x8] sm:$0xff] %vm287, %v214
  %290 = vst.msk [vmem:[#allocation2 + $0x10] sm:$0xff] %vm287, %v219
  %291 = vst.msk [vmem:[#allocation2 + $0x18] sm:$0xff] %vm287, %v224
  %292 = vst.msk [vmem:[#allocation2 + $0x20] sm:$0xff] %vm287, %v229
  %293 = vst.msk [vmem:[#allocation2 + $0x28] sm:$0xff] %vm287, %v234
  %294 = vst.msk [vmem:[#allocation2 + $0x30] sm:$0xff] %vm287, %v239
  %295 = vst.msk [vmem:[#allocation2 + $0x38] sm:$0xff] %vm287, %v244
  %296 = vst.msk [vmem:[#allocation2 + $0x40] sm:$0xff] %vm287, %v249
  %297 = vst.msk [vmem:[#allocation2 + $0x48] sm:$0xff] %vm287, %v254
  %298 = vst.msk [vmem:[#allocation2 + $0x50] sm:$0xff] %vm287, %v259
  %299 = vst.msk [vmem:[#allocation2 + $0x58] sm:$0xff] %vm287, %v264
  %300 = vst.msk [vmem:[#allocation2 + $0x60] sm:$0xff] %vm287, %v269
  %301 = vst.msk [vmem:[#allocation2 + $0x68] sm:$0xff] %vm287, %v274
  %302 = vst.msk [vmem:[#allocation2 + $0x70] sm:$0xff] %vm287, %v279
  %303 = vst.msk [vmem:[#allocation2 + $0x78] sm:$0xff] %vm287, %v284
  %v304 = vld [vmem:[#allocation2] sm:$0xff]
  %v305 = vmul.f32 %v44, 0.0
  %v306 = vadd.f32 %v305, %v304
  %v307 = vsub.f32 %v306, 1.0
  %vm308 = vcmp.gt.f32.partialorder %v307, 0.0
  %v309 = vsel %vm308, 1, 0
  %v310 = vcvt.s32.f32 %v309
  %311 = vst.msk [vmem:[#allocation3] sm:$0xff] %vm287, %v310
  %s312 = scalar_lea.vmem [#allocation2], 8
  %v313 = vld [vmem:[%s312] sm:$0xff]
  %v314 = vmul.f32 %v306, %v44
  %v315 = vadd.f32 %v314, %v313
  %v316 = vsub.f32 %v315, %v310
  %v317 = vsub.f32 %v316, 1.0
  %vm318 = vcmp.gt.f32.partialorder %v317, 0.0
  %v319 = vsel %vm318, 1, 0
  %v320 = vcvt.s32.f32 %v319
  %s321 = scalar_lea.vmem [#allocation3], 8
  %322 = vst.msk [vmem:[%s321] sm:$0xff] %vm287, %v320
  %s323 = scalar_lea.vmem [#allocation2], 16
  %v324 = vld [vmem:[%s323] sm:$0xff]
  %v325 = vmul.f32 %v316, %v44
  %v326 = vadd.f32 %v325, %v324
  %v327 = vsub.f32 %v326, %v320
  %v328 = vsub.f32 %v327, 1.0
  %vm329 = vcmp.gt.f32.partialorder %v328, 0.0
  %v330 = vsel %vm329, 1, 0
  %v331 = vcvt.s32.f32 %v330
  %s332 = scalar_lea.vmem [#allocation3], 16
  %333 = vst.msk [vmem:[%s332] sm:$0xff] %vm287, %v331
  %s334 = scalar_lea.vmem [#allocation2], 24
  %v335 = vld [vmem:[%s334] sm:$0xff]
  %v336 = vmul.f32 %v327, %v44
  %v337 = vadd.f32 %v336, %v335
  %v338 = vsub.f32 %v337, %v331
  %v339 = vsub.f32 %v338, 1.0
  %vm340 = vcmp.gt.f32.partialorder %v339, 0.0
  %v341 = vsel %vm340, 1, 0
  %v342 = vcvt.s32.f32 %v341
  %s343 = scalar_lea.vmem [#allocation3], 24
  %344 = vst.msk [vmem:[%s343] sm:$0xff] %vm287, %v342
  %s345 = scalar_lea.vmem [#allocation2], 32
  %v346 = vld [vmem:[%s345] sm:$0xff]
  %v347 = vmul.f32 %v338, %v44
  %v348 = vadd.f32 %v347, %v346
  %v349 = vsub.f32 %v348, %v342
  %v350 = vsub.f32 %v349, 1.0
  %vm351 = vcmp.gt.f32.partialorder %v350, 0.0
  %v352 = vsel %vm351, 1, 0
  %v353 = vcvt.s32.f32 %v352
  %s354 = scalar_lea.vmem [#allocation3], 32
  %355 = vst.msk [vmem:[%s354] sm:$0xff] %vm287, %v353
  %s356 = scalar_lea.vmem [#allocation2], 40
  %v357 = vld [vmem:[%s356] sm:$0xff]
  %v358 = vmul.f32 %v349, %v44
  %v359 = vadd.f32 %v358, %v357
  %v360 = vsub.f32 %v359, %v353
  %v361 = vsub.f32 %v360, 1.0
  %vm362 = vcmp.gt.f32.partialorder %v361, 0.0
  %v363 = vsel %vm362, 1, 0
  %v364 = vcvt.s32.f32 %v363
  %s365 = scalar_lea.vmem [#allocation3], 40
  %366 = vst.msk [vmem:[%s365] sm:$0xff] %vm287, %v364
  %s367 = scalar_lea.vmem [#allocation2], 48
  %v368 = vld [vmem:[%s367] sm:$0xff]
  %v369 = vmul.f32 %v360, %v44
  %v370 = vadd.f32 %v369, %v368
  %v371 = vsub.f32 %v370, %v364
  %v372 = vsub.f32 %v371, 1.0
  %vm373 = vcmp.gt.f32.partialorder %v372, 0.0
  %v374 = vsel %vm373, 1, 0
  %v375 = vcvt.s32.f32 %v374
  %s376 = scalar_lea.vmem [#allocation3], 48
  %377 = vst.msk [vmem:[%s376] sm:$0xff] %vm287, %v375
  %s378 = scalar_lea.vmem [#allocation2], 56
  %v379 = vld [vmem:[%s378] sm:$0xff]
  %v380 = vmul.f32 %v371, %v44
  %v381 = vadd.f32 %v380, %v379
  %v382 = vsub.f32 %v381, %v375
  %v383 = vsub.f32 %v382, 1.0
  %vm384 = vcmp.gt.f32.partialorder %v383, 0.0
  %v385 = vsel %vm384, 1, 0
  %v386 = vcvt.s32.f32 %v385
  %s387 = scalar_lea.vmem [#allocation3], 56
  %388 = vst.msk [vmem:[%s387] sm:$0xff] %vm287, %v386
  %s389 = scalar_lea.vmem [#allocation2], 64
  %v390 = vld [vmem:[%s389] sm:$0xff]
  %v391 = vmul.f32 %v382, %v44
  %v392 = vadd.f32 %v391, %v390
  %v393 = vsub.f32 %v392, %v386
  %v394 = vsub.f32 %v393, 1.0
  %vm395 = vcmp.gt.f32.partialorder %v394, 0.0
  %v396 = vsel %vm395, 1, 0
  %v397 = vcvt.s32.f32 %v396
  %s398 = scalar_lea.vmem [#allocation3], 64
  %399 = vst.msk [vmem:[%s398] sm:$0xff] %vm287, %v397
  %s400 = scalar_lea.vmem [#allocation2], 72
  %v401 = vld [vmem:[%s400] sm:$0xff]
  %v402 = vmul.f32 %v393, %v44
  %v403 = vadd.f32 %v402, %v401
  %v404 = vsub.f32 %v403, %v397
  %v405 = vsub.f32 %v404, 1.0
  %vm406 = vcmp.gt.f32.partialorder %v405, 0.0
  %v407 = vsel %vm406, 1, 0
  %v408 = vcvt.s32.f32 %v407
  %s409 = scalar_lea.vmem [#allocation3], 72
  %410 = vst.msk [vmem:[%s409] sm:$0xff] %vm287, %v408
  %s411 = scalar_lea.vmem [#allocation2], 80
  %v412 = vld [vmem:[%s411] sm:$0xff]
  %v413 = vmul.f32 %v404, %v44
  %v414 = vadd.f32 %v413, %v412
  %v415 = vsub.f32 %v414, %v408
  %v416 = vsub.f32 %v415, 1.0
  %vm417 = vcmp.gt.f32.partialorder %v416, 0.0
  %v418 = vsel %vm417, 1, 0
  %v419 = vcvt.s32.f32 %v418
  %s420 = scalar_lea.vmem [#allocation3], 80
  %421 = vst.msk [vmem:[%s420] sm:$0xff] %vm287, %v419
  %s422 = scalar_lea.vmem [#allocation2], 88
  %v423 = vld [vmem:[%s422] sm:$0xff]
  %v424 = vmul.f32 %v415, %v44
  %v425 = vadd.f32 %v424, %v423
  %v426 = vsub.f32 %v425, %v419
  %v427 = vsub.f32 %v426, 1.0
  %vm428 = vcmp.gt.f32.partialorder %v427, 0.0
  %v429 = vsel %vm428, 1, 0
  %v430 = vcvt.s32.f32 %v429
  %s431 = scalar_lea.vmem [#allocation3], 88
  %432 = vst.msk [vmem:[%s431] sm:$0xff] %vm287, %v430
  %s433 = scalar_lea.vmem [#allocation2], 96
  %v434 = vld [vmem:[%s433] sm:$0xff]
  %v435 = vmul.f32 %v426, %v44
  %v436 = vadd.f32 %v435, %v434
  %v437 = vsub.f32 %v436, %v430
  %v438 = vsub.f32 %v437, 1.0
  %vm439 = vcmp.gt.f32.partialorder %v438, 0.0
  %v440 = vsel %vm439, 1, 0
  %v441 = vcvt.s32.f32 %v440
  %s442 = scalar_lea.vmem [#allocation3], 96
  %443 = vst.msk [vmem:[%s442] sm:$0xff] %vm287, %v441
  %s444 = scalar_lea.vmem [#allocation2], 104
  %v445 = vld [vmem:[%s444] sm:$0xff]
  %v446 = vmul.f32 %v437, %v44
  %v447 = vadd.f32 %v446, %v445
  %v448 = vsub.f32 %v447, %v441
  %v449 = vsub.f32 %v448, 1.0
  %vm450 = vcmp.gt.f32.partialorder %v449, 0.0
  %v451 = vsel %vm450, 1, 0
  %v452 = vcvt.s32.f32 %v451
  %s453 = scalar_lea.vmem [#allocation3], 104
  %454 = vst.msk [vmem:[%s453] sm:$0xff] %vm287, %v452
  %s455 = scalar_lea.vmem [#allocation2], 112
  %v456 = vld [vmem:[%s455] sm:$0xff]
  %v457 = vmul.f32 %v448, %v44
  %v458 = vadd.f32 %v457, %v456
  %v459 = vsub.f32 %v458, %v452
  %v460 = vsub.f32 %v459, 1.0
  %vm461 = vcmp.gt.f32.partialorder %v460, 0.0
  %v462 = vsel %vm461, 1, 0
  %v463 = vcvt.s32.f32 %v462
  %s464 = scalar_lea.vmem [#allocation3], 112
  %465 = vst.msk [vmem:[%s464] sm:$0xff] %vm287, %v463
  %s466 = scalar_lea.vmem [#allocation2], 120
  %v467 = vld [vmem:[%s466] sm:$0xff]
  %v468 = vmul.f32 %v459, %v44
  %v469 = vadd.f32 %v468, %v467
  %v470 = vsub.f32 %v469, %v463
  %v471 = vsub.f32 %v470, 1.0
  %vm472 = vcmp.gt.f32.partialorder %v471, 0.0
  %v473 = vsel %vm472, 1, 0
  %v474 = vcvt.s32.f32 %v473
  %s475 = scalar_lea.vmem [#allocation3], 120
  %476 = vst.msk [vmem:[%s475] sm:$0xff] %vm287, %v474
  %v477 = vld [vmem:[#allocation3] sm:$0xff]
  %v478 = vld [vmem:[#allocation3 + $0x8] sm:$0xff]
  %v479 = vld [vmem:[#allocation3 + $0x10] sm:$0xff]
  %v480 = vld [vmem:[#allocation3 + $0x18] sm:$0xff]
  %v481 = vld [vmem:[#allocation3 + $0x20] sm:$0xff]
  %v482 = vld [vmem:[#allocation3 + $0x28] sm:$0xff]
  %v483 = vld [vmem:[#allocation3 + $0x30] sm:$0xff]
  %v484 = vld [vmem:[#allocation3 + $0x38] sm:$0xff]
  %v485 = vld [vmem:[#allocation3 + $0x40] sm:$0xff]
  %v486 = vld [vmem:[#allocation3 + $0x48] sm:$0xff]
  %v487 = vld [vmem:[#allocation3 + $0x50] sm:$0xff]
  %v488 = vld [vmem:[#allocation3 + $0x58] sm:$0xff]
  %v489 = vld [vmem:[#allocation3 + $0x60] sm:$0xff]
  %v490 = vld [vmem:[#allocation3 + $0x68] sm:$0xff]
  %v491 = vld [vmem:[#allocation3 + $0x70] sm:$0xff]
  %v492 = vld [vmem:[#allocation3 + $0x78] sm:$0xff]
  %v493 = vlaneseq
  %v494 = vshrl.u32 %v493, 7
  %v495 = vadd.s32 %v494, 8
  %v496 = vlaneseq
  %v497 = vand.u32 %v496, 127
  %v498 = vsub.s32 %v494, %v497
  %v499 = vsub.s32 %v495, %v497
  %v500 = vcvt.s32.f32 %v498
  %v501 = vcvt.s32.f32 %v499
  %v502 = vmax.f32 %v500, 0.0
  %v503 = vmax.f32 %v501, 0.0
  %vm504 = vcmp.ge.s32.totalorder %v494, %v497
  %vm505 = vcmp.ge.s32.totalorder %v495, %v497
  %v506 = vmax.f32 %v39, 1e-30
  %v507 = vlaneseq
  %v508 = vshrl.u32 %v507, 7
  %v509 = vsub.s32 0, %v508
  %v510 = vrot.slane %v64, %v509
  %v511 = vmul.f32 %v477, %v510
  %v512 = vmul.f32 %v478, %v510
  %v513 = vmul.f32 %v479, %v510
  %v514 = vmul.f32 %v480, %v510
  %v515 = vmul.f32 %v481, %v510
  %v516 = vmul.f32 %v482, %v510
  %v517 = vmul.f32 %v483, %v510
  %v518 = vmul.f32 %v484, %v510
  %v519 = vmul.f32 %v485, %v510
  %v520 = vmul.f32 %v486, %v510
  %v521 = vmul.f32 %v487, %v510
  %v522 = vmul.f32 %v488, %v510
  %v523 = vmul.f32 %v489, %v510
  %v524 = vmul.f32 %v490, %v510
  %v525 = vmul.f32 %v491, %v510
  %v526 = vmul.f32 %v492, %v510
  %v527 = vsel %vm287, %v511, 0.0
  %528 = vadd.xlane.f32.xlu0 %v527
  %v529 = vpop.xlane.xlu0 %528
  %v530 = vsel %vm287, %v512, 0.0
  %531 = vadd.xlane.f32.xlu0 %v530
  %v532 = vpop.xlane.xlu0 %531
  %v533 = vsel %vm287, %v513, 0.0
  %534 = vadd.xlane.f32.xlu0 %v533
  %v535 = vpop.xlane.xlu0 %534
  %v536 = vsel %vm287, %v514, 0.0
  %537 = vadd.xlane.f32.xlu0 %v536
  %v538 = vpop.xlane.xlu0 %537
  %v539 = vsel %vm287, %v515, 0.0
  %540 = vadd.xlane.f32.xlu0 %v539
  %v541 = vpop.xlane.xlu0 %540
  %v542 = vsel %vm287, %v516, 0.0
  %543 = vadd.xlane.f32.xlu0 %v542
  %v544 = vpop.xlane.xlu0 %543
  %v545 = vsel %vm287, %v517, 0.0
  %546 = vadd.xlane.f32.xlu0 %v545
  %v547 = vpop.xlane.xlu0 %546
  %v548 = vsel %vm287, %v518, 0.0
  %549 = vadd.xlane.f32.xlu0 %v548
  %v550 = vpop.xlane.xlu0 %549
  %v551 = vsel %vm287, %v519, 0.0
  %552 = vadd.xlane.f32.xlu0 %v551
  %v553 = vpop.xlane.xlu0 %552
  %v554 = vsel %vm287, %v520, 0.0
  %555 = vadd.xlane.f32.xlu0 %v554
  %v556 = vpop.xlane.xlu0 %555
  %v557 = vsel %vm287, %v521, 0.0
  %558 = vadd.xlane.f32.xlu0 %v557
  %v559 = vpop.xlane.xlu0 %558
  %v560 = vsel %vm287, %v522, 0.0
  %561 = vadd.xlane.f32.xlu0 %v560
  %v562 = vpop.xlane.xlu0 %561
  %v563 = vsel %vm287, %v523, 0.0
  %564 = vadd.xlane.f32.xlu0 %v563
  %v565 = vpop.xlane.xlu0 %564
  %v566 = vsel %vm287, %v524, 0.0
  %567 = vadd.xlane.f32.xlu0 %v566
  %v568 = vpop.xlane.xlu0 %567
  %v569 = vsel %vm287, %v525, 0.0
  %570 = vadd.xlane.f32.xlu0 %v569
  %v571 = vpop.xlane.xlu0 %570
  %v572 = vsel %vm287, %v526, 0.0
  %573 = vadd.xlane.f32.xlu0 %v572
  %v574 = vpop.xlane.xlu0 %573
  %s576 = vtos %v66
  %v577 = vstv %s576
  %v579 = vadd.f32 %v529, %v577
  %v580 = vadd.f32 %v532, %v577
  %v581 = vadd.f32 %v535, %v577
  %v582 = vadd.f32 %v538, %v577
  %v583 = vadd.f32 %v541, %v577
  %v584 = vadd.f32 %v544, %v577
  %v585 = vadd.f32 %v547, %v577
  %v586 = vadd.f32 %v550, %v577
  %v587 = vadd.f32 %v553, %v577
  %v588 = vadd.f32 %v556, %v577
  %v589 = vadd.f32 %v559, %v577
  %v590 = vadd.f32 %v562, %v577
  %v591 = vadd.f32 %v565, %v577
  %v592 = vadd.f32 %v568, %v577
  %v593 = vadd.f32 %v571, %v577
  %v594 = vadd.f32 %v574, %v577
  %v595 = vlog2.pop %v506
  %v596 = vmul.f32 %v595, 0.6931472
  %s598 = vtos %v596
  %v599 = vstv %s598
  %v601 = vmul.f32 %v502, %v599
  %v602 = vmul.f32 %v503, %v599
  %v603 = vmul.f32 %v601, 1.442695
  %v604 = vpow.pop %v603
  %v605 = vmul.f32 %v602, 1.442695
  %v606 = vpow.pop %v605
  %v607 = vsel %vm504, %v604, 0.0
  %v608 = vsel %vm505, %v606, 0.0
  %v625 = vlaneseq
  %v626 = vshrl.u32 %v625, 7
  %v627 = vsub.s32 %v497, %v626
  %v628 = vrot.slane %v579, %v627
  %v629 = vlaneseq
  %v630 = vshrl.u32 %v629, 7
  %v631 = vsub.s32 %v497, %v630
  %v632 = vrot.slane %v580, %v631
  %v633 = vlaneseq
  %v634 = vshrl.u32 %v633, 7
  %v635 = vsub.s32 %v497, %v634
  %v636 = vrot.slane %v581, %v635
  %v637 = vlaneseq
  %v638 = vshrl.u32 %v637, 7
  %v639 = vsub.s32 %v497, %v638
  %v640 = vrot.slane %v582, %v639
  %v641 = vlaneseq
  %v642 = vshrl.u32 %v641, 7
  %v643 = vsub.s32 %v497, %v642
  %v644 = vrot.slane %v583, %v643
  %v645 = vlaneseq
  %v646 = vshrl.u32 %v645, 7
  %v647 = vsub.s32 %v497, %v646
  %v648 = vrot.slane %v584, %v647
  %v649 = vlaneseq
  %v650 = vshrl.u32 %v649, 7
  %v651 = vsub.s32 %v497, %v650
  %v652 = vrot.slane %v585, %v651
  %v653 = vlaneseq
  %v654 = vshrl.u32 %v653, 7
  %v655 = vsub.s32 %v497, %v654
  %v656 = vrot.slane %v586, %v655
  %v657 = vlaneseq
  %v658 = vshrl.u32 %v657, 7
  %v659 = vsub.s32 %v497, %v658
  %v660 = vrot.slane %v587, %v659
  %v661 = vlaneseq
  %v662 = vshrl.u32 %v661, 7
  %v663 = vsub.s32 %v497, %v662
  %v664 = vrot.slane %v588, %v663
  %v665 = vlaneseq
  %v666 = vshrl.u32 %v665, 7
  %v667 = vsub.s32 %v497, %v666
  %v668 = vrot.slane %v589, %v667
  %v669 = vlaneseq
  %v670 = vshrl.u32 %v669, 7
  %v671 = vsub.s32 %v497, %v670
  %v672 = vrot.slane %v590, %v671
  %v673 = vlaneseq
  %v674 = vshrl.u32 %v673, 7
  %v675 = vsub.s32 %v497, %v674
  %v676 = vrot.slane %v591, %v675
  %v677 = vlaneseq
  %v678 = vshrl.u32 %v677, 7
  %v679 = vsub.s32 %v497, %v678
  %v680 = vrot.slane %v592, %v679
  %v681 = vlaneseq
  %v682 = vshrl.u32 %v681, 7
  %v683 = vsub.s32 %v497, %v682
  %v684 = vrot.slane %v593, %v683
  %v685 = vlaneseq
  %v686 = vshrl.u32 %v685, 7
  %v687 = vsub.s32 %v497, %v686
  %v688 = vrot.slane %v594, %v687
  %vm689 = vcmask 1041409
  %v690 = vsel %vm689, %v632, %v628
  %vm691 = vcmask 1042434
  %v692 = vsel %vm691, %v636, %v690
  %vm693 = vcmask 1043459
  %v694 = vsel %vm693, %v640, %v692
  %vm695 = vcmask 1044484
  %v696 = vsel %vm695, %v644, %v694
  %vm697 = vcmask 1045509
  %v698 = vsel %vm697, %v648, %v696
  %vm699 = vcmask 1046534
  %v700 = vsel %vm699, %v652, %v698
  %vm701 = vcmask 1047559
  %v702 = vsel %vm701, %v656, %v700
  %v703 = vsel %vm689, %v664, %v660
  %v704 = vsel %vm691, %v668, %v703
  %v705 = vsel %vm693, %v672, %v704
  %v706 = vsel %vm695, %v676, %v705
  %v707 = vsel %vm697, %v680, %v706
  %v708 = vsel %vm699, %v684, %v707
  %v709 = vsel %vm701, %v688, %v708
  %v713 = vsel %vm287, %v607, 0
  %v716 = vsel %vm287, %v608, 0
  %718 = vmatprep.subr.mxu0 0.0
  %719 = vmatpush1.msra.mxu0 %v702
  %720 = vmatprep.subr.mxu0 0.0
  %721 = vmatpush1.msra.mxu0 %v709
  %722 = vmatprep.subr.mxu0 0.0
  %723 = vmatpush1.msra.mxu0 0.0
  %724 = vmatprep.subr.mxu0 0.0
  %725 = vmatpush1.msra.mxu0 0.0
  %726 = vmatprep.subr.mxu0 0.0
  %727 = vmatpush1.msra.mxu0 0.0
  %728 = vmatprep.subr.mxu0 0.0
  %729 = vmatpush1.msra.mxu0 0.0
  %730 = vmatprep.subr.mxu0 0.0
  %731 = vmatpush1.msra.mxu0 0.0
  %732 = vmatprep.subr.mxu0 0.0
  %733 = vmatpush1.msra.mxu0 0.0
  %734 = vmatprep.subr.mxu0 0.0
  %735 = vmatpush1.msra.mxu0 0.0
  %736 = vmatprep.subr.mxu0 0.0
  %737 = vmatpush1.msra.mxu0 0.0
  %738 = vmatprep.subr.mxu0 0.0
  %739 = vmatpush1.msra.mxu0 0.0
  %740 = vmatprep.subr.mxu0 0.0
  %741 = vmatpush1.msra.mxu0 0.0
  %742 = vmatprep.subr.mxu0 0.0
  %743 = vmatpush1.msra.mxu0 0.0
  %744 = vmatprep.subr.mxu0 0.0
  %745 = vmatpush1.msra.mxu0 0.0
  %746 = vmatprep.subr.mxu0 0.0
  %747 = vmatpush1.msra.mxu0 0.0
  %748 = vmatprep.subr.mxu0 0.0
  %749 = vmatpush1.msra.mxu0 0.0
  %750 = vmatprep.subr.mxu0 0.0
  %751 = vmatpush1.msra.mxu0 0.0
  %752 = vmatprep.subr.mxu0 0.0
  %753 = vmatpush1.msra.mxu0 0.0
  %754 = vmatprep.subr.mxu0 0.0
  %755 = vmatpush1.msra.mxu0 0.0
  %756 = vmatprep.subr.mxu0 0.0
  %757 = vmatpush1.msra.mxu0 0.0
  %758 = vmatprep.subr.mxu0 0.0
  %759 = vmatpush1.msra.mxu0 0.0
  %760 = vmatprep.subr.mxu0 0.0
  %761 = vmatpush1.msra.mxu0 0.0
  %762 = vmatprep.subr.mxu0 0.0
  %763 = vmatpush1.msra.mxu0 0.0
  %764 = vmatprep.subr.mxu0 0.0
  %765 = vmatpush1.msra.mxu0 0.0
  %766 = vmatprep.subr.mxu0 0.0
  %767 = vmatpush1.msra.mxu0 0.0
  %768 = vmatprep.subr.mxu0 0.0
  %769 = vmatpush1.msra.mxu0 0.0
  %770 = vmatprep.subr.mxu0 0.0
  %771 = vmatpush1.msra.mxu0 0.0
  %772 = vmatprep.subr.mxu0 0.0
  %773 = vmatpush1.msra.mxu0 0.0
  %774 = vmatprep.subr.mxu0 0.0
  %775 = vmatpush1.msra.mxu0 0.0
  %776 = vmatprep.subr.mxu0 0.0
  %777 = vmatpush1.msra.mxu0 0.0
  %778 = vmatprep.subr.mxu0 0.0
  %779 = vmatpush1.msra.mxu0 0.0
  %780 = vmatprep.subr.mxu0 0.0
  %781 = vmatpush1.msra.mxu0 0.0
  %782 = vmatprep.mubr.f32.mxu0 0.0
  %783 = vmatmul.mubr.f32.gmra.mrb[0].mxu0 %v713
  %v784 = vpop.f32.mrb[0].mxu0
  %v785 = vadd.f32 0.0, %v784
  %v786 = vpop.f32.mrb[0].mxu0
  %787 = vmatprep.mubr.f32.mxu0 0.0
  %788 = vmatmul.mubr.f32.gmra.mrb[0].mxu0 %v716
  %v789 = vpop.f32.mrb[0].mxu0
  %v790 = vadd.f32 0.0, %v789
  %v791 = vpop.f32.mrb[0].mxu0
  %792 = vdwg.mxu0
  %vm793 = vcmask 64512
  %794 = vst.msk [vmem:[%s7] sm:$0xff] %vm793, %v785
  %795 = vst.msk [vmem:[%s7 + $0x8] sm:$0xff] %vm793, %v790
  %v796 = vlaneseq
  %v797 = vshrl.u32 %v796, 7
  %v798 = vsub.s32 1, %v797
  %v799 = vrot.slane %v64, %v798
  %v800 = vmul.f32 %v477, %v799
  %v801 = vmul.f32 %v478, %v799
  %v802 = vmul.f32 %v479, %v799
  %v803 = vmul.f32 %v480, %v799
  %v804 = vmul.f32 %v481, %v799
  %v805 = vmul.f32 %v482, %v799
  %v806 = vmul.f32 %v483, %v799
  %v807 = vmul.f32 %v484, %v799
  %v808 = vmul.f32 %v485, %v799
  %v809 = vmul.f32 %v486, %v799
  %v810 = vmul.f32 %v487, %v799
  %v811 = vmul.f32 %v488, %v799
  %v812 = vmul.f32 %v489, %v799
  %v813 = vmul.f32 %v490, %v799
  %v814 = vmul.f32 %v491, %v799
  %v815 = vmul.f32 %v492, %v799
  %v816 = vsel %vm287, %v800, 0.0
  %817 = vadd.xlane.f32.xlu0 %v816
  %v818 = vpop.xlane.xlu0 %817
  %v819 = vsel %vm287, %v801, 0.0
  %820 = vadd.xlane.f32.xlu0 %v819
  %v821 = vpop.xlane.xlu0 %820
  %v822 = vsel %vm287, %v802, 0.0
  %823 = vadd.xlane.f32.xlu0 %v822
  %v824 = vpop.xlane.xlu0 %823
  %v825 = vsel %vm287, %v803, 0.0
  %826 = vadd.xlane.f32.xlu0 %v825
  %v827 = vpop.xlane.xlu0 %826
  %v828 = vsel %vm287, %v804, 0.0
  %829 = vadd.xlane.f32.xlu0 %v828
  %v830 = vpop.xlane.xlu0 %829
  %v831 = vsel %vm287, %v805, 0.0
  %832 = vadd.xlane.f32.xlu0 %v831
  %v833 = vpop.xlane.xlu0 %832
  %v834 = vsel %vm287, %v806, 0.0
  %835 = vadd.xlane.f32.xlu0 %v834
  %v836 = vpop.xlane.xlu0 %835
  %v837 = vsel %vm287, %v807, 0.0
  %838 = vadd.xlane.f32.xlu0 %v837
  %v839 = vpop.xlane.xlu0 %838
  %v840 = vsel %vm287, %v808, 0.0
  %841 = vadd.xlane.f32.xlu0 %v840
  %v842 = vpop.xlane.xlu0 %841
  %v843 = vsel %vm287, %v809, 0.0
  %844 = vadd.xlane.f32.xlu0 %v843
  %v845 = vpop.xlane.xlu0 %844
  %v846 = vsel %vm287, %v810, 0.0
  %847 = vadd.xlane.f32.xlu0 %v846
  %v848 = vpop.xlane.xlu0 %847
  %v849 = vsel %vm287, %v811, 0.0
  %850 = vadd.xlane.f32.xlu0 %v849
  %v851 = vpop.xlane.xlu0 %850
  %v852 = vsel %vm287, %v812, 0.0
  %853 = vadd.xlane.f32.xlu0 %v852
  %v854 = vpop.xlane.xlu0 %853
  %v855 = vsel %vm287, %v813, 0.0
  %856 = vadd.xlane.f32.xlu0 %v855
  %v857 = vpop.xlane.xlu0 %856
  %v858 = vsel %vm287, %v814, 0.0
  %859 = vadd.xlane.f32.xlu0 %v858
  %v860 = vpop.xlane.xlu0 %859
  %v861 = vsel %vm287, %v815, 0.0
  %862 = vadd.xlane.f32.xlu0 %v861
  %v863 = vpop.xlane.xlu0 %862
  %v864 = vrot.slane %v66, 1
  %s865 = vtos %v864
  %v866 = vstv %s865
  %v868 = vadd.f32 %v818, %v866
  %v869 = vadd.f32 %v821, %v866
  %v870 = vadd.f32 %v824, %v866
  %v871 = vadd.f32 %v827, %v866
  %v872 = vadd.f32 %v830, %v866
  %v873 = vadd.f32 %v833, %v866
  %v874 = vadd.f32 %v836, %v866
  %v875 = vadd.f32 %v839, %v866
  %v876 = vadd.f32 %v842, %v866
  %v877 = vadd.f32 %v845, %v866
  %v878 = vadd.f32 %v848, %v866
  %v879 = vadd.f32 %v851, %v866
  %v880 = vadd.f32 %v854, %v866
  %v881 = vadd.f32 %v857, %v866
  %v882 = vadd.f32 %v860, %v866
  %v883 = vadd.f32 %v863, %v866
  %v884 = vrot.slane %v596, 1
  %s885 = vtos %v884
  %v886 = vstv %s885
  %v888 = vmul.f32 %v502, %v886
  %v889 = vmul.f32 %v503, %v886
  %v890 = vmul.f32 %v888, 1.442695
  %v891 = vpow.pop %v890
  %v892 = vmul.f32 %v889, 1.442695
  %v893 = vpow.pop %v892
  %v894 = vsel %vm504, %v891, 0.0
  %v895 = vsel %vm505, %v893, 0.0
  %v912 = vlaneseq
  %v913 = vshrl.u32 %v912, 7
  %v914 = vsub.s32 %v497, %v913
  %v915 = vrot.slane %v868, %v914
  %v916 = vlaneseq
  %v917 = vshrl.u32 %v916, 7
  %v918 = vsub.s32 %v497, %v917
  %v919 = vrot.slane %v869, %v918
  %v920 = vlaneseq
  %v921 = vshrl.u32 %v920, 7
  %v922 = vsub.s32 %v497, %v921
  %v923 = vrot.slane %v870, %v922
  %v924 = vlaneseq
  %v925 = vshrl.u32 %v924, 7
  %v926 = vsub.s32 %v497, %v925
  %v927 = vrot.slane %v871, %v926
  %v928 = vlaneseq
  %v929 = vshrl.u32 %v928, 7
  %v930 = vsub.s32 %v497, %v929
  %v931 = vrot.slane %v872, %v930
  %v932 = vlaneseq
  %v933 = vshrl.u32 %v932, 7
  %v934 = vsub.s32 %v497, %v933
  %v935 = vrot.slane %v873, %v934
  %v936 = vlaneseq
  %v937 = vshrl.u32 %v936, 7
  %v938 = vsub.s32 %v497, %v937
  %v939 = vrot.slane %v874, %v938
  %v940 = vlaneseq
  %v941 = vshrl.u32 %v940, 7
  %v942 = vsub.s32 %v497, %v941
  %v943 = vrot.slane %v875, %v942
  %v944 = vlaneseq
  %v945 = vshrl.u32 %v944, 7
  %v946 = vsub.s32 %v497, %v945
  %v947 = vrot.slane %v876, %v946
  %v948 = vlaneseq
  %v949 = vshrl.u32 %v948, 7
  %v950 = vsub.s32 %v497, %v949
  %v951 = vrot.slane %v877, %v950
  %v952 = vlaneseq
  %v953 = vshrl.u32 %v952, 7
  %v954 = vsub.s32 %v497, %v953
  %v955 = vrot.slane %v878, %v954
  %v956 = vlaneseq
  %v957 = vshrl.u32 %v956, 7
  %v958 = vsub.s32 %v497, %v957
  %v959 = vrot.slane %v879, %v958
  %v960 = vlaneseq
  %v961 = vshrl.u32 %v960, 7
  %v962 = vsub.s32 %v497, %v961
  %v963 = vrot.slane %v880, %v962
  %v964 = vlaneseq
  %v965 = vshrl.u32 %v964, 7
  %v966 = vsub.s32 %v497, %v965
  %v967 = vrot.slane %v881, %v966
  %v968 = vlaneseq
  %v969 = vshrl.u32 %v968, 7
  %v970 = vsub.s32 %v497, %v969
  %v971 = vrot.slane %v882, %v970
  %v972 = vlaneseq
  %v973 = vshrl.u32 %v972, 7
  %v974 = vsub.s32 %v497, %v973
  %v975 = vrot.slane %v883, %v974
  %v976 = vsel %vm689, %v919, %v915
  %v977 = vsel %vm691, %v923, %v976
  %v978 = vsel %vm693, %v927, %v977
  %v979 = vsel %vm695, %v931, %v978
  %v980 = vsel %vm697, %v935, %v979
  %v981 = vsel %vm699, %v939, %v980
  %v982 = vsel %vm701, %v943, %v981
  %v983 = vsel %vm689, %v951, %v947
  %v984 = vsel %vm691, %v955, %v983
  %v985 = vsel %vm693, %v959, %v984
  %v986 = vsel %vm695, %v963, %v985
  %v987 = vsel %vm697, %v967, %v986
  %v988 = vsel %vm699, %v971, %v987
  %v989 = vsel %vm701, %v975, %v988
  %v993 = vsel %vm287, %v894, 0
  %v996 = vsel %vm287, %v895, 0
  %998 = vmatprep.subr.mxu0 0.0
  %999 = vmatpush1.msra.mxu0 %v982
  %1000 = vmatprep.subr.mxu0 0.0
  %1001 = vmatpush1.msra.mxu0 %v989
  %1002 = vmatprep.subr.mxu0 0.0
  %1003 = vmatpush1.msra.mxu0 0.0
  %1004 = vmatprep.subr.mxu0 0.0
  %1005 = vmatpush1.msra.mxu0 0.0
  %1006 = vmatprep.subr.mxu0 0.0
  %1007 = vmatpush1.msra.mxu0 0.0
  %1008 = vmatprep.subr.mxu0 0.0
  %1009 = vmatpush1.msra.mxu0 0.0
  %1010 = vmatprep.subr.mxu0 0.0
  %1011 = vmatpush1.msra.mxu0 0.0
  %1012 = vmatprep.subr.mxu0 0.0
  %1013 = vmatpush1.msra.mxu0 0.0
  %1014 = vmatprep.subr.mxu0 0.0
  %1015 = vmatpush1.msra.mxu0 0.0
  %1016 = vmatprep.subr.mxu0 0.0
  %1017 = vmatpush1.msra.mxu0 0.0
  %1018 = vmatprep.subr.mxu0 0.0
  %1019 = vmatpush1.msra.mxu0 0.0
  %1020 = vmatprep.subr.mxu0 0.0
  %1021 = vmatpush1.msra.mxu0 0.0
  %1022 = vmatprep.subr.mxu0 0.0
  %1023 = vmatpush1.msra.mxu0 0.0
  %1024 = vmatprep.subr.mxu0 0.0
  %1025 = vmatpush1.msra.mxu0 0.0
  %1026 = vmatprep.subr.mxu0 0.0
  %1027 = vmatpush1.msra.mxu0 0.0
  %1028 = vmatprep.subr.mxu0 0.0
  %1029 = vmatpush1.msra.mxu0 0.0
  %1030 = vmatprep.subr.mxu0 0.0
  %1031 = vmatpush1.msra.mxu0 0.0
  %1032 = vmatprep.subr.mxu0 0.0
  %1033 = vmatpush1.msra.mxu0 0.0
  %1034 = vmatprep.subr.mxu0 0.0
  %1035 = vmatpush1.msra.mxu0 0.0
  %1036 = vmatprep.subr.mxu0 0.0
  %1037 = vmatpush1.msra.mxu0 0.0
  %1038 = vmatprep.subr.mxu0 0.0
  %1039 = vmatpush1.msra.mxu0 0.0
  %1040 = vmatprep.subr.mxu0 0.0
  %1041 = vmatpush1.msra.mxu0 0.0
  %1042 = vmatprep.subr.mxu0 0.0
  %1043 = vmatpush1.msra.mxu0 0.0
  %1044 = vmatprep.subr.mxu0 0.0
  %1045 = vmatpush1.msra.mxu0 0.0
  %1046 = vmatprep.subr.mxu0 0.0
  %1047 = vmatpush1.msra.mxu0 0.0
  %1048 = vmatprep.subr.mxu0 0.0
  %1049 = vmatpush1.msra.mxu0 0.0
  %1050 = vmatprep.subr.mxu0 0.0
  %1051 = vmatpush1.msra.mxu0 0.0
  %1052 = vmatprep.subr.mxu0 0.0
  %1053 = vmatpush1.msra.mxu0 0.0
  %1054 = vmatprep.subr.mxu0 0.0
  %1055 = vmatpush1.msra.mxu0 0.0
  %1056 = vmatprep.subr.mxu0 0.0
  %1057 = vmatpush1.msra.mxu0 0.0
  %1058 = vmatprep.subr.mxu0 0.0
  %1059 = vmatpush1.msra.mxu0 0.0
  %1060 = vmatprep.subr.mxu0 0.0
  %1061 = vmatpush1.msra.mxu0 0.0
  %1062 = vmatprep.mubr.f32.mxu0 0.0
  %1063 = vmatmul.mubr.f32.gmra.mrb[0].mxu0 %v993
  %v1064 = vpop.f32.mrb[0].mxu0
  %v1065 = vadd.f32 0.0, %v1064
  %v1066 = vpop.f32.mrb[0].mxu0
  %1067 = vmatprep.mubr.f32.mxu0 0.0
  %1068 = vmatmul.mubr.f32.gmra.mrb[0].mxu0 %v996
  %v1069 = vpop.f32.mrb[0].mxu0
  %v1070 = vadd.f32 0.0, %v1069
  %v1071 = vpop.f32.mrb[0].mxu0
  %1072 = vdwg.mxu0
  %s1073 = scalar_lea.vmem %s7, 16
  %1074 = vst.msk [vmem:[%s1073] sm:$0xff] %vm793, %v1065
  %1075 = vst.msk [vmem:[%s1073 + $0x8] sm:$0xff] %vm793, %v1070
  // Predicated region
  $region30: #{dense_vanilla_forward.1} parent=0 // pred_check
    _
  $region31: #{dense_vanilla_forward.1} parent=0 // pred_check_branch
    %1077 = sbr.rel (0) target = $region33
  $region32: #{dense_vanilla_forward.1} parent=0 // pred_region
    _
  $region33: #{dense_vanilla_forward.1} parent=0 // pred_fallthru
    _
  // Predicated region
  $region34: #{dense_vanilla_forward.1} parent=0 // pred_check
    _
  $region35: #{dense_vanilla_forward.1} parent=0 // pred_check_branch
    %1079 = sbr.rel (0) target = $region37
  $region36: #{dense_vanilla_forward.1} parent=0 // pred_region
    _
  $region37: #{dense_vanilla_forward.1} parent=0 // pred_fallthru
    _

</llo_original>
